<compile_context>
chip_gen: v6e
topology: v6e:2x2x1
jax: 0.10.0
libtpu: 0.0.40
codegen_flags: <defaults>
</compile_context>

<pallas_src>
import numpy as np

import jax
import jax.numpy as jnp
from jax.experimental import pallas as pl
from jax.experimental.pallas import tpu as pltpu

OUT_W = 128                    # lane-dense packed output width (pi | q | q_pi | 0-pad)
MXU_DTYPE = jnp.bfloat16       # matmul operand dtype (accumulation is always f32)


# ----------------------------------------------------------------------------
# Fused forward kernel (one batch block per grid step, everything VMEM-resident)
# ----------------------------------------------------------------------------
def _actor_critic_kernel(p1_ref, a_ref, g2_ref,
                         w1_ref, b1_ref, w2_ref, b2_ref, w3_ref, b3_ref,
                         wpq_ref, bpq_ref, pw2_ref, pb2_ref,
                         qw1a_ref, qw2b_ref, qb2_ref,
                         out_ref):
    f32 = jnp.float32
    mxu = w1_ref.dtype                      # bf16 (or f32 if MXU_DTYPE == f32)

    def dot(x, y):
        return jnp.dot(x, y, preferred_element_type=f32)

    bm = out_ref.shape[0]                   # images in this batch block
    kk = g2_ref.shape[0]                    # 9 conv2 taps
    hidden = wpq_ref.shape[1] // 2
    adim = pw2_ref.shape[1]

    # ---- conv stages, unrolled per image in the block (all 2-D matmuls) -----
    embs = []
    for b in range(bm):
        # conv1: im2col patches (49, 32) @ (32, 32) + bias, relu
        h1 = jnp.maximum(dot(p1_ref[b], w1_ref[...]) + b1_ref[...], 0.0)
        h1m = h1.astype(mxu)

        # conv2: one-hot row-gather per tap, lane-concat -> single K=9*32 matmul
        taps2 = [dot(g2_ref[k], h1m) for k in range(kk)]        # 9 x (9, 32)
        patches2 = jnp.concatenate(taps2, axis=-1).astype(mxu)  # (9, 288)
        h2 = jnp.maximum(dot(patches2, w2_ref[...]) + b2_ref[...], 0.0)  # (9, 64)

        # conv3 (1x1 spatial output): flatten h2 rows along lanes -> K=9*64 matmul
        taps3 = [h2[r:r + 1, :] for r in range(h2.shape[0])]    # 9 x (1, 64)
        patches3 = jnp.concatenate(taps3, axis=-1).astype(mxu)  # (1, 576)
        embs.append(dot(patches3, w3_ref[...]) + b3_ref[...])   # (1, num_features)

    emb = jnp.concatenate(embs, axis=0)                         # (bm, F)
    embm = emb.astype(mxu)

    # ---- fused policy-hidden + q-base matmul: (bm, F) @ (F, 2H) -------------
    hq = dot(embm, wpq_ref[...]) + bpq_ref[...]                 # (bm, 2H)
    ph = jnp.maximum(hq[:, :hidden], 0.0)                       # policy hidden
    qbase = hq[:, hidden:]                                      # emb part of q hidden

    # ---- policy head: linear + stable softplus + 0.01 -----------------------
    pi_lin = dot(ph.astype(mxu), pw2_ref[...]) + pb2_ref[...]   # (bm, adim)
    pi = (jnp.maximum(pi_lin, 0.0)
          + jnp.log(1.0 + jnp.exp(-jnp.abs(pi_lin))) + 0.01)

    # ---- q evaluated at a and pi; shared q-base, one block-diag head matmul -
    qh = jnp.concatenate(
        [jnp.maximum(qbase + dot(a_ref[...], qw1a_ref[...]), 0.0),
         jnp.maximum(qbase + dot(pi.astype(mxu), qw1a_ref[...]), 0.0)],
        axis=-1)                                                # (bm, 2H)
    qq = dot(qh.astype(mxu), qw2b_ref[...]) + qb2_ref[...]      # (bm, 2) = [q | q_pi]

    # ---- single lane-dense full-width store ---------------------------------
    pad = out_ref.shape[1] - adim - 2
    pieces = [pi, qq]
    if pad:
        pieces.append(jnp.zeros((bm, pad), f32))
    out_ref[...] = jnp.concatenate(pieces, axis=-1).astype(out_ref.dtype)


# ----------------------------------------------------------------------------
# Wrapper-side glue (layout plumbing + weight fusion; traced once under jit)
# ----------------------------------------------------------------------------
def im2col(x_nhwc, kh, kw, stride):
    B, H, W, C = x_nhwc.shape
    Ho = (H - kh) // stride + 1
    Wo = (W - kw) // stride + 1
    patches = []
    for i in range(kh):
        for j in range(kw):
            patches.append(
                x_nhwc[:,
                       i: i + (Ho - 1) * stride + 1: stride,
                       j: j + (Wo - 1) * stride + 1: stride,
                       :])
    p = jnp.concatenate(patches, axis=-1)            # (B, Ho, Wo, kh*kw*C)
    return p.reshape(B, Ho * Wo, kh * kw * C), Ho, Wo


def conv_w_to_matmul(w_oihw):
    # (O, I, KH, KW) -> (KH, KW, I, O) -> (KH*KW*I, O); matches im2col order.
    O, I, KH, KW = w_oihw.shape
    return jnp.transpose(w_oihw, (2, 3, 1, 0)).reshape(KH * KW * I, O)


def _tap_gather(H, W, kh, kw, stride):
    """Batch-independent one-hot gathers: (kh*kw, Ho*Wo, H*W)."""
    Ho = (H - kh) // stride + 1
    Wo = (W - kw) // stride + 1
    g = np.zeros((kh * kw, Ho * Wo, H * W), np.float32)
    for i in range(kh):
        for j in range(kw):
            k = i * kw + j
            for oh in range(Ho):
                for ow in range(Wo):
                    g[k, oh * Wo + ow,
                      (oh * stride + i) * W + (ow * stride + j)] = 1.0
    return jnp.asarray(g), Ho, Wo


def _forward_impl(params, x_nchw, a):
    B = x_nchw.shape[0]
    adim = a.shape[1]
    assert adim + 2 <= OUT_W, "packed output assumes action_dim + 2 <= OUT_W"

    x = jnp.transpose(x_nchw, (0, 2, 3, 1)).astype(jnp.float32)  # NCHW -> NHWC

    p1, h1o, w1o = im2col(x, 4, 4, 2)                 # (B, 49, 32), rows (oh, ow)
    g2, h2o, w2o = _tap_gather(h1o, w1o, 3, 3, 2)     # (9, 9, 49) one-hot, B-independent
    h3o, w3o = h2o - 2, w2o - 2
    assert h3o == 1 and w3o == 1, "kernel specialised to 1x1 conv3 output (16x16 input)"
    # TODO(synk): general img_shape (conv3 output > 1x1) needs a channel-major flatten.

    w1m = conv_w_to_matmul(params["cw1"])
    w2m = conv_w_to_matmul(params["cw2"])
    w3m = conv_w_to_matmul(params["cw3"])

    F = params["pw1"].shape[0]
    hidden = params["pw1"].shape[1]
    qw1e = params["qw1"][:F]                          # emb part of q hidden weights
    qw1a = params["qw1"][F:]                          # action part of q hidden weights

    # fused policy-hidden + q-base weight, lane-dense (F, 2*hidden)
    w_pq = jnp.concatenate([params["pw1"], qw1e], axis=1)
    b_pq = jnp.concatenate([params["pb1"], params["qb1"]]).reshape(1, -1)
    # block-diagonal q head weight -> [q(a) | q(pi)] in one matmul
    qw2b = jnp.zeros((2 * hidden, 2), jnp.float32)
    qw2b = qw2b.at[:hidden, 0:1].set(params["qw2"]).at[hidden:, 1:2].set(params["qw2"])
    qb2r = jnp.concatenate([params["qb2"], params["qb2"]]).reshape(1, 2)

    mxu = MXU_DTYPE
    inputs = (
        p1.astype(mxu), a.astype(mxu), g2.astype(mxu),
        w1m.astype(mxu), params["cb1"].reshape(1, -1),
        w2m.astype(mxu), params["cb2"].reshape(1, -1),
        w3m.astype(mxu), params["cb3"].reshape(1, -1),
        w_pq.astype(mxu), b_pq,
        params["pw2"].astype(mxu), params["pb2"].reshape(1, -1),
        qw1a.astype(mxu), qw2b.astype(mxu), qb2r,
    )

    # batch block: multiple of 8 rows when possible, else whole batch (grid = 1)
    bm = min(B, 8) if B % 8 == 0 else B
    S1, K1 = p1.shape[1], p1.shape[2]

    whole = pl.BlockSpec(memory_space=pltpu.MemorySpace.VMEM)
    in_specs = [
        pl.BlockSpec((bm, S1, K1), lambda i: (i, 0, 0)),   # im2col patches
        pl.BlockSpec((bm, adim), lambda i: (i, 0)),        # actions
    ] + [whole] * (len(inputs) - 2)                        # weights / biases / gathers

    flops = 2 * B * (
        S1 * K1 * w1m.shape[1]
        + g2.shape[0] * (h2o * w2o) * S1 * w1m.shape[1]
        + (h2o * w2o) * w2m.shape[0] * w2m.shape[1]
        + w3m.shape[0] * w3m.shape[1]
        + F * 2 * hidden + hidden * adim + 2 * adim * hidden + 2 * hidden * 2)
    bytes_accessed = int(sum(int(np.prod(v.shape)) * v.dtype.itemsize for v in inputs)
                         + B * OUT_W * 4)
    cost = pl.CostEstimate(flops=int(flops), transcendentals=int(2 * B * adim),
                           bytes_accessed=bytes_accessed)

    out = pl.pallas_call(
        _actor_critic_kernel,
        out_shape=jax.ShapeDtypeStruct((B, OUT_W), jnp.float32),
        grid=(B // bm,),
        in_specs=in_specs,
        out_specs=pl.BlockSpec((bm, OUT_W), lambda i: (i, 0)),
        compiler_params=pltpu.CompilerParams(
            dimension_semantics=("parallel",),
            vmem_limit_bytes=32 * 1024 * 1024),
        cost_estimate=cost,
    )(*inputs)

    pi = out[:, :adim]
    q = out[:, adim]
    q_pi = out[:, adim + 1]
    return pi, q, q_pi


actor_critic_forward = jax.jit(_forward_impl)


# ----------------------------------------------------------------------------
# Pure-JAX f32 reference (faithful to the PyTorch module) for correctness check
# ----------------------------------------------------------------------------
def reference_forward(params, x_nchw, a):
    def conv(x, w, b, s):
        y = jax.lax.conv_general_dilated(
            x, w, (s, s), "VALID", dimension_numbers=("NCHW", "OIHW", "NCHW"))
        return y + b[None, :, None, None]

    def softplus(z):
        return jnp.maximum(z, 0.0) + jnp.log(1.0 + jnp.exp(-jnp.abs(z)))

    h = jax.nn.relu(conv(x_nchw, params["cw1"], params["cb1"], 2))
    h = jax.nn.relu(conv(h, params["cw2"], params["cb2"], 2))
    emb = conv(h, params["cw3"], params["cb3"], 1).reshape(x_nchw.shape[0], -1)

    ph = jax.nn.relu(emb @ params["pw1"] + params["pb1"])
    pi = softplus(ph @ params["pw2"] + params["pb2"]) + 0.01

    def q_fn(av):
        qi = jnp.concatenate([emb, av], axis=-1)
        qh = jax.nn.relu(qi @ params["qw1"] + params["qb1"])
        return jnp.squeeze(qh @ params["qw2"] + params["qb2"])

    return pi, q_fn(a), q_fn(pi)


# ----------------------------------------------------------------------------
# Deterministic parameter construction
# ----------------------------------------------------------------------------
def make_params(num_features, action_dim, hidden):
    ks = jax.random.split(jax.random.PRNGKey(42), 10)

    def init(k, shape, scale=0.1):
        return scale * jax.random.normal(k, shape, jnp.float32)

    return {
        # BaseConvNet (PyTorch OIHW conv weights)
        "cw1": init(ks[0], (32, 2, 4, 4)),
        "cb1": init(ks[1], (32,)),
        "cw2": init(ks[2], (64, 32, 3, 3)),
        "cb2": init(ks[3], (64,)),
        "cw3": init(ks[4], (32, 64, 3, 3)),
        "cb3": init(ks[5], (32,)),
        # policy MLP [num_features, hidden, action_dim], zero biases
        "pw1": init(ks[6], (num_features, hidden)),
        "pb1": jnp.zeros((hidden,), jnp.float32),
        "pw2": init(ks[7], (hidden, action_dim)),
        "pb2": jnp.zeros((action_dim,), jnp.float32),
        # q MLP [num_features + action_dim, hidden, 1], zero biases
        "qw1": init(ks[8], (num_features + action_dim, hidden)),
        "qb1": jnp.zeros((hidden,), jnp.float32),
        "qw2": init(ks[9], (hidden, 1)),
        "qb2": jnp.zeros((1,), jnp.float32),
    }


if __name__ == "__main__":
    B = 2
    img_shape = (16, 16)      # get_output_shape -> 1 * 1 * 32 = 32 features
    action_dim = 3
    hidden = 64
    num_features = 32

    key = jax.random.PRNGKey(0)
    kx, ka = jax.random.split(key)
    x = jax.random.normal(kx, (B, 2, img_shape[0], img_shape[1]), jnp.float32)
    a = jax.random.normal(ka, (B, action_dim), jnp.float32)

    params = make_params(num_features, action_dim, hidden)

    pi, q, q_pi = actor_critic_forward(params, x, a)
    jax.block_until_ready((pi, q, q_pi))

    pi_r, q_r, q_pi_r = reference_forward(params, x, a)
    # bf16 MXU operands (f32 accumulation) -> loosen tolerance vs. the f32 reference.
    tol = 1e-4 if MXU_DTYPE == jnp.float32 else 5e-2
    assert pi.shape == (B, action_dim) and q.shape == (B,) and q_pi.shape == (B,)
    assert jnp.allclose(pi, pi_r, atol=tol, rtol=tol)
    assert jnp.allclose(q, q_r, atol=tol, rtol=tol)
    assert jnp.allclose(q_pi, q_pi_r, atol=tol, rtol=tol)

    print("KERNEL_OK")
</pallas_src>

<mosaic_0001>
module attributes {stable_mosaic.version = 11 : i64} {
  func.func @_actor_critic_kernel(%arg0: i32, %arg1: memref<2x49x32xbf16, #tpu.memory_space<vmem>>, %arg2: memref<2x3xbf16, #tpu.memory_space<vmem>>, %arg3: memref<9x9x49xbf16, #tpu.memory_space<vmem>>, %arg4: memref<32x32xbf16, #tpu.memory_space<vmem>>, %arg5: memref<1x32xf32, #tpu.memory_space<vmem>>, %arg6: memref<288x64xbf16, #tpu.memory_space<vmem>>, %arg7: memref<1x64xf32, #tpu.memory_space<vmem>>, %arg8: memref<576x32xbf16, #tpu.memory_space<vmem>>, %arg9: memref<1x32xf32, #tpu.memory_space<vmem>>, %arg10: memref<32x128xbf16, #tpu.memory_space<vmem>>, %arg11: memref<1x128xf32, #tpu.memory_space<vmem>>, %arg12: memref<64x3xbf16, #tpu.memory_space<vmem>>, %arg13: memref<1x3xf32, #tpu.memory_space<vmem>>, %arg14: memref<3x64xbf16, #tpu.memory_space<vmem>>, %arg15: memref<128x2xbf16, #tpu.memory_space<vmem>>, %arg16: memref<1x2xf32, #tpu.memory_space<vmem>>, %arg17: memref<2x128xf32, #tpu.memory_space<vmem>>) attributes {dimension_semantics = [#tpu.dimension_semantics<parallel>], iteration_bounds = array<i64: 1>, scalar_prefetch = 0 : i64, scratch_operands = 0 : i64, tpu.core_type = #tpu.core_type<tc>, window_params = [{transform_indices = @transform_0, window_bounds = array<i64: 2, 49, 32>}, {transform_indices = @transform_1, window_bounds = array<i64: 2, 3>}, {pipeline_mode = #tpu.pipeline_mode<synchronous>, transform_indices = @transform_2, window_bounds = array<i64: 9, 9, 49>}, {pipeline_mode = #tpu.pipeline_mode<synchronous>, transform_indices = @transform_3, window_bounds = array<i64: 32, 32>}, {pipeline_mode = #tpu.pipeline_mode<synchronous>, transform_indices = @transform_4, window_bounds = array<i64: 1, 32>}, {pipeline_mode = #tpu.pipeline_mode<synchronous>, transform_indices = @transform_5, window_bounds = array<i64: 288, 64>}, {pipeline_mode = #tpu.pipeline_mode<synchronous>, transform_indices = @transform_6, window_bounds = array<i64: 1, 64>}, {pipeline_mode = #tpu.pipeline_mode<synchronous>, transform_indices = @transform_7, window_bounds = array<i64: 576, 32>}, {pipeline_mode = #tpu.pipeline_mode<synchronous>, transform_indices = @transform_8, window_bounds = array<i64: 1, 32>}, {pipeline_mode = #tpu.pipeline_mode<synchronous>, transform_indices = @transform_9, window_bounds = array<i64: 32, 128>}, {pipeline_mode = #tpu.pipeline_mode<synchronous>, transform_indices = @transform_10, window_bounds = array<i64: 1, 128>}, {pipeline_mode = #tpu.pipeline_mode<synchronous>, transform_indices = @transform_11, window_bounds = array<i64: 64, 3>}, {pipeline_mode = #tpu.pipeline_mode<synchronous>, transform_indices = @transform_12, window_bounds = array<i64: 1, 3>}, {pipeline_mode = #tpu.pipeline_mode<synchronous>, transform_indices = @transform_13, window_bounds = array<i64: 3, 64>}, {pipeline_mode = #tpu.pipeline_mode<synchronous>, transform_indices = @transform_14, window_bounds = array<i64: 128, 2>}, {pipeline_mode = #tpu.pipeline_mode<synchronous>, transform_indices = @transform_15, window_bounds = array<i64: 1, 2>}, {transform_indices = @transform_16, window_bounds = array<i64: 2, 128>}]} {
    %c0 = arith.constant 0 : index
    %c0_0 = arith.constant 0 : index
    %c0_1 = arith.constant 0 : index
    %0 = vector.load %arg1[%c0, %c0_0, %c0_1] : memref<2x49x32xbf16, #tpu.memory_space<vmem>>, vector<1x49x32xbf16>
    %1 = vector.shape_cast %0 : vector<1x49x32xbf16> to vector<49x32xbf16>
    %c0_2 = arith.constant 0 : index
    %c0_3 = arith.constant 0 : index
    %2 = vector.load %arg4[%c0_2, %c0_3] : memref<32x32xbf16, #tpu.memory_space<vmem>>, vector<32x32xbf16>
    %cst = arith.constant dense<0.000000e+00> : vector<49x32xf32>
    %3 = tpu.matmul %1, %2, %cst {dimension_numbers = #tpu.dot_dimension_numbers<[1], [0], [0], [1], [0, 0, 1, 1], [], []>} : vector<49x32xbf16>, vector<32x32xbf16>, vector<49x32xf32> -> vector<49x32xf32>
    %c0_4 = arith.constant 0 : index
    %c0_5 = arith.constant 0 : index
    %4 = vector.load %arg5[%c0_4, %c0_5] : memref<1x32xf32, #tpu.memory_space<vmem>>, vector<1x32xf32>
    %5 = vector.broadcast %4 : vector<1x32xf32> to vector<49x32xf32>
    %6 = arith.addf %3, %5 : vector<49x32xf32>
    %cst_6 = arith.constant 0.000000e+00 : f32
    %7 = vector.broadcast %cst_6 : f32 to vector<49x32xf32>
    %8 = arith.maximumf %6, %7 : vector<49x32xf32>
    %9 = arith.truncf %8 : vector<49x32xf32> to vector<49x32xbf16>
    %c0_7 = arith.constant 0 : index
    %c0_8 = arith.constant 0 : index
    %c0_9 = arith.constant 0 : index
    %10 = vector.load %arg3[%c0_7, %c0_8, %c0_9] : memref<9x9x49xbf16, #tpu.memory_space<vmem>>, vector<1x9x49xbf16>
    %11 = vector.shape_cast %10 : vector<1x9x49xbf16> to vector<9x49xbf16>
    %cst_10 = arith.constant dense<0.000000e+00> : vector<9x32xf32>
    %12 = tpu.matmul %11, %9, %cst_10 {dimension_numbers = #tpu.dot_dimension_numbers<[1], [0], [0], [1], [0, 0, 1, 1], [], []>} : vector<9x49xbf16>, vector<49x32xbf16>, vector<9x32xf32> -> vector<9x32xf32>
    %c1 = arith.constant 1 : index
    %c0_11 = arith.constant 0 : index
    %c0_12 = arith.constant 0 : index
    %13 = vector.load %arg3[%c1, %c0_11, %c0_12] : memref<9x9x49xbf16, #tpu.memory_space<vmem>>, vector<1x9x49xbf16>
    %14 = vector.shape_cast %13 : vector<1x9x49xbf16> to vector<9x49xbf16>
    %cst_13 = arith.constant dense<0.000000e+00> : vector<9x32xf32>
    %15 = tpu.matmul %14, %9, %cst_13 {dimension_numbers = #tpu.dot_dimension_numbers<[1], [0], [0], [1], [0, 0, 1, 1], [], []>} : vector<9x49xbf16>, vector<49x32xbf16>, vector<9x32xf32> -> vector<9x32xf32>
    %c2 = arith.constant 2 : index
    %c0_14 = arith.constant 0 : index
    %c0_15 = arith.constant 0 : index
    %16 = vector.load %arg3[%c2, %c0_14, %c0_15] : memref<9x9x49xbf16, #tpu.memory_space<vmem>>, vector<1x9x49xbf16>
    %17 = vector.shape_cast %16 : vector<1x9x49xbf16> to vector<9x49xbf16>
    %cst_16 = arith.constant dense<0.000000e+00> : vector<9x32xf32>
    %18 = tpu.matmul %17, %9, %cst_16 {dimension_numbers = #tpu.dot_dimension_numbers<[1], [0], [0], [1], [0, 0, 1, 1], [], []>} : vector<9x49xbf16>, vector<49x32xbf16>, vector<9x32xf32> -> vector<9x32xf32>
    %c3 = arith.constant 3 : index
    %c0_17 = arith.constant 0 : index
    %c0_18 = arith.constant 0 : index
    %19 = vector.load %arg3[%c3, %c0_17, %c0_18] : memref<9x9x49xbf16, #tpu.memory_space<vmem>>, vector<1x9x49xbf16>
    %20 = vector.shape_cast %19 : vector<1x9x49xbf16> to vector<9x49xbf16>
    %cst_19 = arith.constant dense<0.000000e+00> : vector<9x32xf32>
    %21 = tpu.matmul %20, %9, %cst_19 {dimension_numbers = #tpu.dot_dimension_numbers<[1], [0], [0], [1], [0, 0, 1, 1], [], []>} : vector<9x49xbf16>, vector<49x32xbf16>, vector<9x32xf32> -> vector<9x32xf32>
    %c4 = arith.constant 4 : index
    %c0_20 = arith.constant 0 : index
    %c0_21 = arith.constant 0 : index
    %22 = vector.load %arg3[%c4, %c0_20, %c0_21] : memref<9x9x49xbf16, #tpu.memory_space<vmem>>, vector<1x9x49xbf16>
    %23 = vector.shape_cast %22 : vector<1x9x49xbf16> to vector<9x49xbf16>
    %cst_22 = arith.constant dense<0.000000e+00> : vector<9x32xf32>
    %24 = tpu.matmul %23, %9, %cst_22 {dimension_numbers = #tpu.dot_dimension_numbers<[1], [0], [0], [1], [0, 0, 1, 1], [], []>} : vector<9x49xbf16>, vector<49x32xbf16>, vector<9x32xf32> -> vector<9x32xf32>
    %c5 = arith.constant 5 : index
    %c0_23 = arith.constant 0 : index
    %c0_24 = arith.constant 0 : index
    %25 = vector.load %arg3[%c5, %c0_23, %c0_24] : memref<9x9x49xbf16, #tpu.memory_space<vmem>>, vector<1x9x49xbf16>
    %26 = vector.shape_cast %25 : vector<1x9x49xbf16> to vector<9x49xbf16>
    %cst_25 = arith.constant dense<0.000000e+00> : vector<9x32xf32>
    %27 = tpu.matmul %26, %9, %cst_25 {dimension_numbers = #tpu.dot_dimension_numbers<[1], [0], [0], [1], [0, 0, 1, 1], [], []>} : vector<9x49xbf16>, vector<49x32xbf16>, vector<9x32xf32> -> vector<9x32xf32>
    %c6 = arith.constant 6 : index
    %c0_26 = arith.constant 0 : index
    %c0_27 = arith.constant 0 : index
    %28 = vector.load %arg3[%c6, %c0_26, %c0_27] : memref<9x9x49xbf16, #tpu.memory_space<vmem>>, vector<1x9x49xbf16>
    %29 = vector.shape_cast %28 : vector<1x9x49xbf16> to vector<9x49xbf16>
    %cst_28 = arith.constant dense<0.000000e+00> : vector<9x32xf32>
    %30 = tpu.matmul %29, %9, %cst_28 {dimension_numbers = #tpu.dot_dimension_numbers<[1], [0], [0], [1], [0, 0, 1, 1], [], []>} : vector<9x49xbf16>, vector<49x32xbf16>, vector<9x32xf32> -> vector<9x32xf32>
    %c7 = arith.constant 7 : index
    %c0_29 = arith.constant 0 : index
    %c0_30 = arith.constant 0 : index
    %31 = vector.load %arg3[%c7, %c0_29, %c0_30] : memref<9x9x49xbf16, #tpu.memory_space<vmem>>, vector<1x9x49xbf16>
    %32 = vector.shape_cast %31 : vector<1x9x49xbf16> to vector<9x49xbf16>
    %cst_31 = arith.constant dense<0.000000e+00> : vector<9x32xf32>
    %33 = tpu.matmul %32, %9, %cst_31 {dimension_numbers = #tpu.dot_dimension_numbers<[1], [0], [0], [1], [0, 0, 1, 1], [], []>} : vector<9x49xbf16>, vector<49x32xbf16>, vector<9x32xf32> -> vector<9x32xf32>
    %c8 = arith.constant 8 : index
    %c0_32 = arith.constant 0 : index
    %c0_33 = arith.constant 0 : index
    %34 = vector.load %arg3[%c8, %c0_32, %c0_33] : memref<9x9x49xbf16, #tpu.memory_space<vmem>>, vector<1x9x49xbf16>
    %35 = vector.shape_cast %34 : vector<1x9x49xbf16> to vector<9x49xbf16>
    %cst_34 = arith.constant dense<0.000000e+00> : vector<9x32xf32>
    %36 = tpu.matmul %35, %9, %cst_34 {dimension_numbers = #tpu.dot_dimension_numbers<[1], [0], [0], [1], [0, 0, 1, 1], [], []>} : vector<9x49xbf16>, vector<49x32xbf16>, vector<9x32xf32> -> vector<9x32xf32>
    %37 = tpu.concatenate %12, %15, %18, %21, %24, %27, %30, %33, %36 in 1 : vector<9x32xf32>, vector<9x32xf32>, vector<9x32xf32>, vector<9x32xf32>, vector<9x32xf32>, vector<9x32xf32>, vector<9x32xf32>, vector<9x32xf32>, vector<9x32xf32> -> vector<9x288xf32>
    %38 = arith.truncf %37 : vector<9x288xf32> to vector<9x288xbf16>
    %c0_35 = arith.constant 0 : index
    %c0_36 = arith.constant 0 : index
    %39 = vector.load %arg6[%c0_35, %c0_36] : memref<288x64xbf16, #tpu.memory_space<vmem>>, vector<288x64xbf16>
    %cst_37 = arith.constant dense<0.000000e+00> : vector<9x64xf32>
    %40 = tpu.matmul %38, %39, %cst_37 {dimension_numbers = #tpu.dot_dimension_numbers<[1], [0], [0], [1], [0, 0, 1, 1], [], []>} : vector<9x288xbf16>, vector<288x64xbf16>, vector<9x64xf32> -> vector<9x64xf32>
    %c0_38 = arith.constant 0 : index
    %c0_39 = arith.constant 0 : index
    %41 = vector.load %arg7[%c0_38, %c0_39] : memref<1x64xf32, #tpu.memory_space<vmem>>, vector<1x64xf32>
    %42 = vector.broadcast %41 : vector<1x64xf32> to vector<9x64xf32>
    %43 = arith.addf %40, %42 : vector<9x64xf32>
    %cst_40 = arith.constant 0.000000e+00 : f32
    %44 = vector.broadcast %cst_40 : f32 to vector<9x64xf32>
    %45 = arith.maximumf %43, %44 : vector<9x64xf32>
    %46 = vector.extract_strided_slice %45 {offsets = [0, 0], sizes = [1, 64], strides = [1, 1]} : vector<9x64xf32> to vector<1x64xf32>
    %47 = vector.extract_strided_slice %45 {offsets = [1, 0], sizes = [1, 64], strides = [1, 1]} : vector<9x64xf32> to vector<1x64xf32>
    %48 = vector.extract_strided_slice %45 {offsets = [2, 0], sizes = [1, 64], strides = [1, 1]} : vector<9x64xf32> to vector<1x64xf32>
    %49 = vector.extract_strided_slice %45 {offsets = [3, 0], sizes = [1, 64], strides = [1, 1]} : vector<9x64xf32> to vector<1x64xf32>
    %50 = vector.extract_strided_slice %45 {offsets = [4, 0], sizes = [1, 64], strides = [1, 1]} : vector<9x64xf32> to vector<1x64xf32>
    %51 = vector.extract_strided_slice %45 {offsets = [5, 0], sizes = [1, 64], strides = [1, 1]} : vector<9x64xf32> to vector<1x64xf32>
    %52 = vector.extract_strided_slice %45 {offsets = [6, 0], sizes = [1, 64], strides = [1, 1]} : vector<9x64xf32> to vector<1x64xf32>
    %53 = vector.extract_strided_slice %45 {offsets = [7, 0], sizes = [1, 64], strides = [1, 1]} : vector<9x64xf32> to vector<1x64xf32>
    %54 = vector.extract_strided_slice %45 {offsets = [8, 0], sizes = [1, 64], strides = [1, 1]} : vector<9x64xf32> to vector<1x64xf32>
    %55 = tpu.concatenate %46, %47, %48, %49, %50, %51, %52, %53, %54 in 1 : vector<1x64xf32>, vector<1x64xf32>, vector<1x64xf32>, vector<1x64xf32>, vector<1x64xf32>, vector<1x64xf32>, vector<1x64xf32>, vector<1x64xf32>, vector<1x64xf32> -> vector<1x576xf32>
    %56 = arith.truncf %55 : vector<1x576xf32> to vector<1x576xbf16>
    %c0_41 = arith.constant 0 : index
    %c0_42 = arith.constant 0 : index
    %57 = vector.load %arg8[%c0_41, %c0_42] : memref<576x32xbf16, #tpu.memory_space<vmem>>, vector<576x32xbf16>
    %cst_43 = arith.constant dense<0.000000e+00> : vector<1x32xf32>
    %58 = tpu.matmul %56, %57, %cst_43 {dimension_numbers = #tpu.dot_dimension_numbers<[1], [0], [0], [1], [0, 0, 1, 1], [], []>} : vector<1x576xbf16>, vector<576x32xbf16>, vector<1x32xf32> -> vector<1x32xf32>
    %c0_44 = arith.constant 0 : index
    %c0_45 = arith.constant 0 : index
    %59 = vector.load %arg9[%c0_44, %c0_45] : memref<1x32xf32, #tpu.memory_space<vmem>>, vector<1x32xf32>
    %60 = arith.addf %58, %59 : vector<1x32xf32>
    %c1_46 = arith.constant 1 : index
    %c0_47 = arith.constant 0 : index
    %c0_48 = arith.constant 0 : index
    %61 = vector.load %arg1[%c1_46, %c0_47, %c0_48] : memref<2x49x32xbf16, #tpu.memory_space<vmem>>, vector<1x49x32xbf16>
    %62 = vector.shape_cast %61 : vector<1x49x32xbf16> to vector<49x32xbf16>
    %c0_49 = arith.constant 0 : index
    %c0_50 = arith.constant 0 : index
    %63 = vector.load %arg4[%c0_49, %c0_50] : memref<32x32xbf16, #tpu.memory_space<vmem>>, vector<32x32xbf16>
    %cst_51 = arith.constant dense<0.000000e+00> : vector<49x32xf32>
    %64 = tpu.matmul %62, %63, %cst_51 {dimension_numbers = #tpu.dot_dimension_numbers<[1], [0], [0], [1], [0, 0, 1, 1], [], []>} : vector<49x32xbf16>, vector<32x32xbf16>, vector<49x32xf32> -> vector<49x32xf32>
    %c0_52 = arith.constant 0 : index
    %c0_53 = arith.constant 0 : index
    %65 = vector.load %arg5[%c0_52, %c0_53] : memref<1x32xf32, #tpu.memory_space<vmem>>, vector<1x32xf32>
    %66 = vector.broadcast %65 : vector<1x32xf32> to vector<49x32xf32>
    %67 = arith.addf %64, %66 : vector<49x32xf32>
    %cst_54 = arith.constant 0.000000e+00 : f32
    %68 = vector.broadcast %cst_54 : f32 to vector<49x32xf32>
    %69 = arith.maximumf %67, %68 : vector<49x32xf32>
    %70 = arith.truncf %69 : vector<49x32xf32> to vector<49x32xbf16>
    %c0_55 = arith.constant 0 : index
    %c0_56 = arith.constant 0 : index
    %c0_57 = arith.constant 0 : index
    %71 = vector.load %arg3[%c0_55, %c0_56, %c0_57] : memref<9x9x49xbf16, #tpu.memory_space<vmem>>, vector<1x9x49xbf16>
    %72 = vector.shape_cast %71 : vector<1x9x49xbf16> to vector<9x49xbf16>
    %cst_58 = arith.constant dense<0.000000e+00> : vector<9x32xf32>
    %73 = tpu.matmul %72, %70, %cst_58 {dimension_numbers = #tpu.dot_dimension_numbers<[1], [0], [0], [1], [0, 0, 1, 1], [], []>} : vector<9x49xbf16>, vector<49x32xbf16>, vector<9x32xf32> -> vector<9x32xf32>
    %c1_59 = arith.constant 1 : index
    %c0_60 = arith.constant 0 : index
    %c0_61 = arith.constant 0 : index
    %74 = vector.load %arg3[%c1_59, %c0_60, %c0_61] : memref<9x9x49xbf16, #tpu.memory_space<vmem>>, vector<1x9x49xbf16>
    %75 = vector.shape_cast %74 : vector<1x9x49xbf16> to vector<9x49xbf16>
    %cst_62 = arith.constant dense<0.000000e+00> : vector<9x32xf32>
    %76 = tpu.matmul %75, %70, %cst_62 {dimension_numbers = #tpu.dot_dimension_numbers<[1], [0], [0], [1], [0, 0, 1, 1], [], []>} : vector<9x49xbf16>, vector<49x32xbf16>, vector<9x32xf32> -> vector<9x32xf32>
    %c2_63 = arith.constant 2 : index
    %c0_64 = arith.constant 0 : index
    %c0_65 = arith.constant 0 : index
    %77 = vector.load %arg3[%c2_63, %c0_64, %c0_65] : memref<9x9x49xbf16, #tpu.memory_space<vmem>>, vector<1x9x49xbf16>
    %78 = vector.shape_cast %77 : vector<1x9x49xbf16> to vector<9x49xbf16>
    %cst_66 = arith.constant dense<0.000000e+00> : vector<9x32xf32>
    %79 = tpu.matmul %78, %70, %cst_66 {dimension_numbers = #tpu.dot_dimension_numbers<[1], [0], [0], [1], [0, 0, 1, 1], [], []>} : vector<9x49xbf16>, vector<49x32xbf16>, vector<9x32xf32> -> vector<9x32xf32>
    %c3_67 = arith.constant 3 : index
    %c0_68 = arith.constant 0 : index
    %c0_69 = arith.constant 0 : index
    %80 = vector.load %arg3[%c3_67, %c0_68, %c0_69] : memref<9x9x49xbf16, #tpu.memory_space<vmem>>, vector<1x9x49xbf16>
    %81 = vector.shape_cast %80 : vector<1x9x49xbf16> to vector<9x49xbf16>
    %cst_70 = arith.constant dense<0.000000e+00> : vector<9x32xf32>
    %82 = tpu.matmul %81, %70, %cst_70 {dimension_numbers = #tpu.dot_dimension_numbers<[1], [0], [0], [1], [0, 0, 1, 1], [], []>} : vector<9x49xbf16>, vector<49x32xbf16>, vector<9x32xf32> -> vector<9x32xf32>
    %c4_71 = arith.constant 4 : index
    %c0_72 = arith.constant 0 : index
    %c0_73 = arith.constant 0 : index
    %83 = vector.load %arg3[%c4_71, %c0_72, %c0_73] : memref<9x9x49xbf16, #tpu.memory_space<vmem>>, vector<1x9x49xbf16>
    %84 = vector.shape_cast %83 : vector<1x9x49xbf16> to vector<9x49xbf16>
    %cst_74 = arith.constant dense<0.000000e+00> : vector<9x32xf32>
    %85 = tpu.matmul %84, %70, %cst_74 {dimension_numbers = #tpu.dot_dimension_numbers<[1], [0], [0], [1], [0, 0, 1, 1], [], []>} : vector<9x49xbf16>, vector<49x32xbf16>, vector<9x32xf32> -> vector<9x32xf32>
    %c5_75 = arith.constant 5 : index
    %c0_76 = arith.constant 0 : index
    %c0_77 = arith.constant 0 : index
    %86 = vector.load %arg3[%c5_75, %c0_76, %c0_77] : memref<9x9x49xbf16, #tpu.memory_space<vmem>>, vector<1x9x49xbf16>
    %87 = vector.shape_cast %86 : vector<1x9x49xbf16> to vector<9x49xbf16>
    %cst_78 = arith.constant dense<0.000000e+00> : vector<9x32xf32>
    %88 = tpu.matmul %87, %70, %cst_78 {dimension_numbers = #tpu.dot_dimension_numbers<[1], [0], [0], [1], [0, 0, 1, 1], [], []>} : vector<9x49xbf16>, vector<49x32xbf16>, vector<9x32xf32> -> vector<9x32xf32>
    %c6_79 = arith.constant 6 : index
    %c0_80 = arith.constant 0 : index
    %c0_81 = arith.constant 0 : index
    %89 = vector.load %arg3[%c6_79, %c0_80, %c0_81] : memref<9x9x49xbf16, #tpu.memory_space<vmem>>, vector<1x9x49xbf16>
    %90 = vector.shape_cast %89 : vector<1x9x49xbf16> to vector<9x49xbf16>
    %cst_82 = arith.constant dense<0.000000e+00> : vector<9x32xf32>
    %91 = tpu.matmul %90, %70, %cst_82 {dimension_numbers = #tpu.dot_dimension_numbers<[1], [0], [0], [1], [0, 0, 1, 1], [], []>} : vector<9x49xbf16>, vector<49x32xbf16>, vector<9x32xf32> -> vector<9x32xf32>
    %c7_83 = arith.constant 7 : index
    %c0_84 = arith.constant 0 : index
    %c0_85 = arith.constant 0 : index
    %92 = vector.load %arg3[%c7_83, %c0_84, %c0_85] : memref<9x9x49xbf16, #tpu.memory_space<vmem>>, vector<1x9x49xbf16>
    %93 = vector.shape_cast %92 : vector<1x9x49xbf16> to vector<9x49xbf16>
    %cst_86 = arith.constant dense<0.000000e+00> : vector<9x32xf32>
    %94 = tpu.matmul %93, %70, %cst_86 {dimension_numbers = #tpu.dot_dimension_numbers<[1], [0], [0], [1], [0, 0, 1, 1], [], []>} : vector<9x49xbf16>, vector<49x32xbf16>, vector<9x32xf32> -> vector<9x32xf32>
    %c8_87 = arith.constant 8 : index
    %c0_88 = arith.constant 0 : index
    %c0_89 = arith.constant 0 : index
    %95 = vector.load %arg3[%c8_87, %c0_88, %c0_89] : memref<9x9x49xbf16, #tpu.memory_space<vmem>>, vector<1x9x49xbf16>
    %96 = vector.shape_cast %95 : vector<1x9x49xbf16> to vector<9x49xbf16>
    %cst_90 = arith.constant dense<0.000000e+00> : vector<9x32xf32>
    %97 = tpu.matmul %96, %70, %cst_90 {dimension_numbers = #tpu.dot_dimension_numbers<[1], [0], [0], [1], [0, 0, 1, 1], [], []>} : vector<9x49xbf16>, vector<49x32xbf16>, vector<9x32xf32> -> vector<9x32xf32>
    %98 = tpu.concatenate %73, %76, %79, %82, %85, %88, %91, %94, %97 in 1 : vector<9x32xf32>, vector<9x32xf32>, vector<9x32xf32>, vector<9x32xf32>, vector<9x32xf32>, vector<9x32xf32>, vector<9x32xf32>, vector<9x32xf32>, vector<9x32xf32> -> vector<9x288xf32>
    %99 = arith.truncf %98 : vector<9x288xf32> to vector<9x288xbf16>
    %c0_91 = arith.constant 0 : index
    %c0_92 = arith.constant 0 : index
    %100 = vector.load %arg6[%c0_91, %c0_92] : memref<288x64xbf16, #tpu.memory_space<vmem>>, vector<288x64xbf16>
    %cst_93 = arith.constant dense<0.000000e+00> : vector<9x64xf32>
    %101 = tpu.matmul %99, %100, %cst_93 {dimension_numbers = #tpu.dot_dimension_numbers<[1], [0], [0], [1], [0, 0, 1, 1], [], []>} : vector<9x288xbf16>, vector<288x64xbf16>, vector<9x64xf32> -> vector<9x64xf32>
    %c0_94 = arith.constant 0 : index
    %c0_95 = arith.constant 0 : index
    %102 = vector.load %arg7[%c0_94, %c0_95] : memref<1x64xf32, #tpu.memory_space<vmem>>, vector<1x64xf32>
    %103 = vector.broadcast %102 : vector<1x64xf32> to vector<9x64xf32>
    %104 = arith.addf %101, %103 : vector<9x64xf32>
    %cst_96 = arith.constant 0.000000e+00 : f32
    %105 = vector.broadcast %cst_96 : f32 to vector<9x64xf32>
    %106 = arith.maximumf %104, %105 : vector<9x64xf32>
    %107 = vector.extract_strided_slice %106 {offsets = [0, 0], sizes = [1, 64], strides = [1, 1]} : vector<9x64xf32> to vector<1x64xf32>
    %108 = vector.extract_strided_slice %106 {offsets = [1, 0], sizes = [1, 64], strides = [1, 1]} : vector<9x64xf32> to vector<1x64xf32>
    %109 = vector.extract_strided_slice %106 {offsets = [2, 0], sizes = [1, 64], strides = [1, 1]} : vector<9x64xf32> to vector<1x64xf32>
    %110 = vector.extract_strided_slice %106 {offsets = [3, 0], sizes = [1, 64], strides = [1, 1]} : vector<9x64xf32> to vector<1x64xf32>
    %111 = vector.extract_strided_slice %106 {offsets = [4, 0], sizes = [1, 64], strides = [1, 1]} : vector<9x64xf32> to vector<1x64xf32>
    %112 = vector.extract_strided_slice %106 {offsets = [5, 0], sizes = [1, 64], strides = [1, 1]} : vector<9x64xf32> to vector<1x64xf32>
    %113 = vector.extract_strided_slice %106 {offsets = [6, 0], sizes = [1, 64], strides = [1, 1]} : vector<9x64xf32> to vector<1x64xf32>
    %114 = vector.extract_strided_slice %106 {offsets = [7, 0], sizes = [1, 64], strides = [1, 1]} : vector<9x64xf32> to vector<1x64xf32>
    %115 = vector.extract_strided_slice %106 {offsets = [8, 0], sizes = [1, 64], strides = [1, 1]} : vector<9x64xf32> to vector<1x64xf32>
    %116 = tpu.concatenate %107, %108, %109, %110, %111, %112, %113, %114, %115 in 1 : vector<1x64xf32>, vector<1x64xf32>, vector<1x64xf32>, vector<1x64xf32>, vector<1x64xf32>, vector<1x64xf32>, vector<1x64xf32>, vector<1x64xf32>, vector<1x64xf32> -> vector<1x576xf32>
    %117 = arith.truncf %116 : vector<1x576xf32> to vector<1x576xbf16>
    %c0_97 = arith.constant 0 : index
    %c0_98 = arith.constant 0 : index
    %118 = vector.load %arg8[%c0_97, %c0_98] : memref<576x32xbf16, #tpu.memory_space<vmem>>, vector<576x32xbf16>
    %cst_99 = arith.constant dense<0.000000e+00> : vector<1x32xf32>
    %119 = tpu.matmul %117, %118, %cst_99 {dimension_numbers = #tpu.dot_dimension_numbers<[1], [0], [0], [1], [0, 0, 1, 1], [], []>} : vector<1x576xbf16>, vector<576x32xbf16>, vector<1x32xf32> -> vector<1x32xf32>
    %c0_100 = arith.constant 0 : index
    %c0_101 = arith.constant 0 : index
    %120 = vector.load %arg9[%c0_100, %c0_101] : memref<1x32xf32, #tpu.memory_space<vmem>>, vector<1x32xf32>
    %121 = arith.addf %119, %120 : vector<1x32xf32>
    %122 = tpu.concatenate %60, %121 in 0 : vector<1x32xf32>, vector<1x32xf32> -> vector<2x32xf32>
    %123 = arith.truncf %122 : vector<2x32xf32> to vector<2x32xbf16>
    %c0_102 = arith.constant 0 : index
    %c0_103 = arith.constant 0 : index
    %124 = vector.load %arg10[%c0_102, %c0_103] : memref<32x128xbf16, #tpu.memory_space<vmem>>, vector<32x128xbf16>
    %cst_104 = arith.constant dense<0.000000e+00> : vector<2x128xf32>
    %125 = tpu.matmul %123, %124, %cst_104 {dimension_numbers = #tpu.dot_dimension_numbers<[1], [0], [0], [1], [0, 0, 1, 1], [], []>} : vector<2x32xbf16>, vector<32x128xbf16>, vector<2x128xf32> -> vector<2x128xf32>
    %c0_105 = arith.constant 0 : index
    %c0_106 = arith.constant 0 : index
    %126 = vector.load %arg11[%c0_105, %c0_106] : memref<1x128xf32, #tpu.memory_space<vmem>>, vector<1x128xf32>
    %127 = vector.broadcast %126 : vector<1x128xf32> to vector<2x128xf32>
    %128 = arith.addf %125, %127 : vector<2x128xf32>
    %129 = vector.extract_strided_slice %128 {offsets = [0, 0], sizes = [2, 64], strides = [1, 1]} : vector<2x128xf32> to vector<2x64xf32>
    %cst_107 = arith.constant 0.000000e+00 : f32
    %130 = vector.broadcast %cst_107 : f32 to vector<2x64xf32>
    %131 = arith.maximumf %129, %130 : vector<2x64xf32>
    %132 = vector.extract_strided_slice %128 {offsets = [0, 64], sizes = [2, 64], strides = [1, 1]} : vector<2x128xf32> to vector<2x64xf32>
    %133 = arith.truncf %131 : vector<2x64xf32> to vector<2x64xbf16>
    %c0_108 = arith.constant 0 : index
    %c0_109 = arith.constant 0 : index
    %134 = vector.load %arg12[%c0_108, %c0_109] : memref<64x3xbf16, #tpu.memory_space<vmem>>, vector<64x3xbf16>
    %cst_110 = arith.constant dense<0.000000e+00> : vector<2x3xf32>
    %135 = tpu.matmul %133, %134, %cst_110 {dimension_numbers = #tpu.dot_dimension_numbers<[1], [0], [0], [1], [0, 0, 1, 1], [], []>} : vector<2x64xbf16>, vector<64x3xbf16>, vector<2x3xf32> -> vector<2x3xf32>
    %c0_111 = arith.constant 0 : index
    %c0_112 = arith.constant 0 : index
    %136 = vector.load %arg13[%c0_111, %c0_112] : memref<1x3xf32, #tpu.memory_space<vmem>>, vector<1x3xf32>
    %137 = vector.broadcast %136 : vector<1x3xf32> to vector<2x3xf32>
    %138 = arith.addf %135, %137 : vector<2x3xf32>
    %cst_113 = arith.constant 0.000000e+00 : f32
    %139 = vector.broadcast %cst_113 : f32 to vector<2x3xf32>
    %140 = arith.maximumf %138, %139 : vector<2x3xf32>
    %141 = math.absf %138 : vector<2x3xf32>
    %cst_114 = arith.constant 0.000000e+00 : f32
    %142 = vector.broadcast %cst_114 : f32 to vector<2x3xf32>
    %143 = arith.subf %142, %141 : vector<2x3xf32>
    %144 = math.exp %143 : vector<2x3xf32>
    %cst_115 = arith.constant 1.000000e+00 : f32
    %145 = vector.broadcast %cst_115 : f32 to vector<2x3xf32>
    %146 = arith.addf %145, %144 : vector<2x3xf32>
    %147 = math.log %146 : vector<2x3xf32>
    %148 = arith.addf %140, %147 : vector<2x3xf32>
    %cst_116 = arith.constant 0.00999999977 : f32
    %149 = vector.broadcast %cst_116 : f32 to vector<2x3xf32>
    %150 = arith.addf %148, %149 : vector<2x3xf32>
    %c0_117 = arith.constant 0 : index
    %c0_118 = arith.constant 0 : index
    %151 = vector.load %arg2[%c0_117, %c0_118] : memref<2x3xbf16, #tpu.memory_space<vmem>>, vector<2x3xbf16>
    %c0_119 = arith.constant 0 : index
    %c0_120 = arith.constant 0 : index
    %152 = vector.load %arg14[%c0_119, %c0_120] : memref<3x64xbf16, #tpu.memory_space<vmem>>, vector<3x64xbf16>
    %cst_121 = arith.constant dense<0.000000e+00> : vector<2x64xf32>
    %153 = tpu.matmul %151, %152, %cst_121 {dimension_numbers = #tpu.dot_dimension_numbers<[1], [0], [0], [1], [0, 0, 1, 1], [], []>} : vector<2x3xbf16>, vector<3x64xbf16>, vector<2x64xf32> -> vector<2x64xf32>
    %154 = arith.addf %132, %153 : vector<2x64xf32>
    %cst_122 = arith.constant 0.000000e+00 : f32
    %155 = vector.broadcast %cst_122 : f32 to vector<2x64xf32>
    %156 = arith.maximumf %154, %155 : vector<2x64xf32>
    %157 = arith.truncf %150 : vector<2x3xf32> to vector<2x3xbf16>
    %c0_123 = arith.constant 0 : index
    %c0_124 = arith.constant 0 : index
    %158 = vector.load %arg14[%c0_123, %c0_124] : memref<3x64xbf16, #tpu.memory_space<vmem>>, vector<3x64xbf16>
    %cst_125 = arith.constant dense<0.000000e+00> : vector<2x64xf32>
    %159 = tpu.matmul %157, %158, %cst_125 {dimension_numbers = #tpu.dot_dimension_numbers<[1], [0], [0], [1], [0, 0, 1, 1], [], []>} : vector<2x3xbf16>, vector<3x64xbf16>, vector<2x64xf32> -> vector<2x64xf32>
    %160 = arith.addf %132, %159 : vector<2x64xf32>
    %cst_126 = arith.constant 0.000000e+00 : f32
    %161 = vector.broadcast %cst_126 : f32 to vector<2x64xf32>
    %162 = arith.maximumf %160, %161 : vector<2x64xf32>
    %163 = tpu.concatenate %156, %162 in 1 : vector<2x64xf32>, vector<2x64xf32> -> vector<2x128xf32>
    %164 = arith.truncf %163 : vector<2x128xf32> to vector<2x128xbf16>
    %c0_127 = arith.constant 0 : index
    %c0_128 = arith.constant 0 : index
    %165 = vector.load %arg15[%c0_127, %c0_128] : memref<128x2xbf16, #tpu.memory_space<vmem>>, vector<128x2xbf16>
    %cst_129 = arith.constant dense<0.000000e+00> : vector<2x2xf32>
    %166 = tpu.matmul %164, %165, %cst_129 {dimension_numbers = #tpu.dot_dimension_numbers<[1], [0], [0], [1], [0, 0, 1, 1], [], []>} : vector<2x128xbf16>, vector<128x2xbf16>, vector<2x2xf32> -> vector<2x2xf32>
    %c0_130 = arith.constant 0 : index
    %c0_131 = arith.constant 0 : index
    %167 = vector.load %arg16[%c0_130, %c0_131] : memref<1x2xf32, #tpu.memory_space<vmem>>, vector<1x2xf32>
    %168 = vector.broadcast %167 : vector<1x2xf32> to vector<2x2xf32>
    %169 = arith.addf %166, %168 : vector<2x2xf32>
    %cst_132 = arith.constant 0.000000e+00 : f32
    %170 = vector.broadcast %cst_132 : f32 to vector<2x123xf32>
    %171 = tpu.concatenate %150, %169, %170 in 1 : vector<2x3xf32>, vector<2x2xf32>, vector<2x123xf32> -> vector<2x128xf32>
    %c0_133 = arith.constant 0 : index
    %c0_134 = arith.constant 0 : index
    %172 = vector.load %arg17[%c0_133, %c0_134] : memref<2x128xf32, #tpu.memory_space<vmem>>, vector<2x128xf32>
    tpu.vector_store %arg17[%c0_133, %c0_134], %171 {strides = array<i32>} : memref<2x128xf32, #tpu.memory_space<vmem>>, vector<2x128xf32>,
    return
  }
  func.func @transform_0(%arg0: i32) -> (i32, i32, i32) {
    %c0_i32 = arith.constant 0 : i32
    %c0_i32_0 = arith.constant 0 : i32
    %c0_i32_1 = arith.constant 0 : i32
    return %arg0, %c0_i32, %c0_i32_0 : i32, i32, i32
  }
  func.func @transform_1(%arg0: i32) -> (i32, i32) {
    %c0_i32 = arith.constant 0 : i32
    %c0_i32_0 = arith.constant 0 : i32
    return %arg0, %c0_i32 : i32, i32
  }
  func.func @transform_2(%arg0: i32) -> (i32, i32, i32) {
    %c0_i32 = arith.constant 0 : i32
    %c0_i32_0 = arith.constant 0 : i32
    %c0_i32_1 = arith.constant 0 : i32
    %c0_i32_2 = arith.constant 0 : i32
    return %c0_i32, %c0_i32_0, %c0_i32_1 : i32, i32, i32
  }
  func.func @transform_3(%arg0: i32) -> (i32, i32) {
    %c0_i32 = arith.constant 0 : i32
    %c0_i32_0 = arith.constant 0 : i32
    %c0_i32_1 = arith.constant 0 : i32
    return %c0_i32, %c0_i32_0 : i32, i32
  }
  func.func @transform_4(%arg0: i32) -> (i32, i32) {
    %c0_i32 = arith.constant 0 : i32
    %c0_i32_0 = arith.constant 0 : i32
    %c0_i32_1 = arith.constant 0 : i32
    return %c0_i32, %c0_i32_0 : i32, i32
  }
  func.func @transform_5(%arg0: i32) -> (i32, i32) {
    %c0_i32 = arith.constant 0 : i32
    %c0_i32_0 = arith.constant 0 : i32
    %c0_i32_1 = arith.constant 0 : i32
    return %c0_i32, %c0_i32_0 : i32, i32
  }
  func.func @transform_6(%arg0: i32) -> (i32, i32) {
    %c0_i32 = arith.constant 0 : i32
    %c0_i32_0 = arith.constant 0 : i32
    %c0_i32_1 = arith.constant 0 : i32
    return %c0_i32, %c0_i32_0 : i32, i32
  }
  func.func @transform_7(%arg0: i32) -> (i32, i32) {
    %c0_i32 = arith.constant 0 : i32
    %c0_i32_0 = arith.constant 0 : i32
    %c0_i32_1 = arith.constant 0 : i32
    return %c0_i32, %c0_i32_0 : i32, i32
  }
  func.func @transform_8(%arg0: i32) -> (i32, i32) {
    %c0_i32 = arith.constant 0 : i32
    %c0_i32_0 = arith.constant 0 : i32
    %c0_i32_1 = arith.constant 0 : i32
    return %c0_i32, %c0_i32_0 : i32, i32
  }
  func.func @transform_9(%arg0: i32) -> (i32, i32) {
    %c0_i32 = arith.constant 0 : i32
    %c0_i32_0 = arith.constant 0 : i32
    %c0_i32_1 = arith.constant 0 : i32
    return %c0_i32, %c0_i32_0 : i32, i32
  }
  func.func @transform_10(%arg0: i32) -> (i32, i32) {
    %c0_i32 = arith.constant 0 : i32
    %c0_i32_0 = arith.constant 0 : i32
    %c0_i32_1 = arith.constant 0 : i32
    return %c0_i32, %c0_i32_0 : i32, i32
  }
  func.func @transform_11(%arg0: i32) -> (i32, i32) {
    %c0_i32 = arith.constant 0 : i32
    %c0_i32_0 = arith.constant 0 : i32
    %c0_i32_1 = arith.constant 0 : i32
    return %c0_i32, %c0_i32_0 : i32, i32
  }
  func.func @transform_12(%arg0: i32) -> (i32, i32) {
    %c0_i32 = arith.constant 0 : i32
    %c0_i32_0 = arith.constant 0 : i32
    %c0_i32_1 = arith.constant 0 : i32
    return %c0_i32, %c0_i32_0 : i32, i32
  }
  func.func @transform_13(%arg0: i32) -> (i32, i32) {
    %c0_i32 = arith.constant 0 : i32
    %c0_i32_0 = arith.constant 0 : i32
    %c0_i32_1 = arith.constant 0 : i32
    return %c0_i32, %c0_i32_0 : i32, i32
  }
  func.func @transform_14(%arg0: i32) -> (i32, i32) {
    %c0_i32 = arith.constant 0 : i32
    %c0_i32_0 = arith.constant 0 : i32
    %c0_i32_1 = arith.constant 0 : i32
    return %c0_i32, %c0_i32_0 : i32, i32
  }
  func.func @transform_15(%arg0: i32) -> (i32, i32) {
    %c0_i32 = arith.constant 0 : i32
    %c0_i32_0 = arith.constant 0 : i32
    %c0_i32_1 = arith.constant 0 : i32
    return %c0_i32, %c0_i32_0 : i32, i32
  }
  func.func @transform_16(%arg0: i32) -> (i32, i32) {
    %c0_i32 = arith.constant 0 : i32
    %c0_i32_0 = arith.constant 0 : i32
    return %arg0, %c0_i32 : i32, i32
  }
}

</mosaic_0001>

<llo_original>
// kernel: _forward_impl.1
$region0: #{_forward_impl.1}
  #allocation0 [shape = 'u32[]', space=smem, size = 0x4, offset = 0x4, fixed_abs, tag = 'smem constant byte address 0x4 - core index']
  #allocation1 [shape = 'u32[144,128]{1,0:T(1,128)}', space=vmem, size = 0x12000, scoped, tag = 'internal scratch']
  %s0 = inlined_call_operand.vmem [shape: bf16[2,49,32], index: 0, kind: input, shape index: {}]
  %s1 = inlined_call_operand.vmem [shape: bf16[2,3], index: 1, kind: input, shape index: {}]
  %s2 = inlined_call_operand.vmem [shape: bf16[9,9,49], index: 2, kind: input, shape index: {}]
  %s3 = inlined_call_operand.vmem [shape: bf16[32,32], index: 3, kind: input, shape index: {}]
  %s4 = inlined_call_operand.vmem [shape: f32[1,32], index: 4, kind: input, shape index: {}]
  %s5 = inlined_call_operand.vmem [shape: bf16[288,64], index: 5, kind: input, shape index: {}]
  %s6 = inlined_call_operand.vmem [shape: f32[1,64], index: 6, kind: input, shape index: {}]
  %s7 = inlined_call_operand.vmem [shape: bf16[576,32], index: 7, kind: input, shape index: {}]
  %s8 = inlined_call_operand.vmem [shape: f32[1,32], index: 8, kind: input, shape index: {}]
  %s9 = inlined_call_operand.vmem [shape: bf16[32,128], index: 9, kind: input, shape index: {}]
  %s10 = inlined_call_operand.vmem [shape: f32[1,128], index: 10, kind: input, shape index: {}]
  %s11 = inlined_call_operand.vmem [shape: bf16[64,3], index: 11, kind: input, shape index: {}]
  %s12 = inlined_call_operand.vmem [shape: f32[1,3], index: 12, kind: input, shape index: {}]
  %s13 = inlined_call_operand.vmem [shape: bf16[3,64], index: 13, kind: input, shape index: {}]
  %s14 = inlined_call_operand.vmem [shape: bf16[128,2], index: 14, kind: input, shape index: {}]
  %s15 = inlined_call_operand.vmem [shape: f32[1,2], index: 15, kind: input, shape index: {}]
  %s16 = inlined_call_operand.vmem [shape: f32[2,128], index: 16, kind: output, shape index: {}]
  %s17 = sld [smem:[#allocation0]]
  $region74: #{_forward_impl.1} parent=0
    _
  %s19 = ssub.s32 1, %s17
  %s20 = scalar_select 0, %s19, %s17
  // Predicated region
  $region2: #{_forward_impl.1} parent=0 // pred_check
    _
  $region3: #{_forward_impl.1} parent=0 // pred_check_branch
    %22 = sbr.rel (0) target = $region5
  $region4: #{_forward_impl.1} parent=0 // pred_region
    _
  $region5: #{_forward_impl.1} parent=0 // pred_fallthru
    _
  // Predicated region
  $region6: #{_forward_impl.1} parent=0 // pred_check
    _
  $region7: #{_forward_impl.1} parent=0 // pred_check_branch
    %24 = sbr.rel (0) target = $region9
  $region8: #{_forward_impl.1} parent=0 // pred_region
    _
  $region9: #{_forward_impl.1} parent=0 // pred_fallthru
    _
  // Predicated region
  $region10: #{_forward_impl.1} parent=0 // pred_check
    _
  $region11: #{_forward_impl.1} parent=0 // pred_check_branch
    %26 = sbr.rel (0) target = $region13
  $region12: #{_forward_impl.1} parent=0 // pred_region
    _
  $region13: #{_forward_impl.1} parent=0 // pred_fallthru
    _
  // Predicated region
  $region14: #{_forward_impl.1} parent=0 // pred_check
    _
  $region15: #{_forward_impl.1} parent=0 // pred_check_branch
    %28 = sbr.rel (0) target = $region17
  $region16: #{_forward_impl.1} parent=0 // pred_region
    _
  $region17: #{_forward_impl.1} parent=0 // pred_fallthru
    _
  // Predicated region
  $region18: #{_forward_impl.1} parent=0 // pred_check
    _
  $region19: #{_forward_impl.1} parent=0 // pred_check_branch
    %30 = sbr.rel (0) target = $region21
  $region20: #{_forward_impl.1} parent=0 // pred_region
    _
  $region21: #{_forward_impl.1} parent=0 // pred_fallthru
    _
  // Predicated region
  $region22: #{_forward_impl.1} parent=0 // pred_check
    _
  $region23: #{_forward_impl.1} parent=0 // pred_check_branch
    %32 = sbr.rel (0) target = $region25
  $region24: #{_forward_impl.1} parent=0 // pred_region
    _
  $region25: #{_forward_impl.1} parent=0 // pred_fallthru
    _
  // Predicated region
  $region26: #{_forward_impl.1} parent=0 // pred_check
    _
  $region27: #{_forward_impl.1} parent=0 // pred_check_branch
    %34 = sbr.rel (0) target = $region29
  $region28: #{_forward_impl.1} parent=0 // pred_region
    _
  $region29: #{_forward_impl.1} parent=0 // pred_fallthru
    _
  // Predicated region
  $region30: #{_forward_impl.1} parent=0 // pred_check
    _
  $region31: #{_forward_impl.1} parent=0 // pred_check_branch
    %36 = sbr.rel (0) target = $region33
  $region32: #{_forward_impl.1} parent=0 // pred_region
    _
  $region33: #{_forward_impl.1} parent=0 // pred_fallthru
    _
  // Predicated region
  $region34: #{_forward_impl.1} parent=0 // pred_check
    _
  $region35: #{_forward_impl.1} parent=0 // pred_check_branch
    %38 = sbr.rel (0) target = $region37
  $region36: #{_forward_impl.1} parent=0 // pred_region
    _
  $region37: #{_forward_impl.1} parent=0 // pred_fallthru
    _
  // Predicated region
  $region38: #{_forward_impl.1} parent=0 // pred_check
    _
  $region39: #{_forward_impl.1} parent=0 // pred_check_branch
    %40 = sbr.rel (0) target = $region41
  $region40: #{_forward_impl.1} parent=0 // pred_region
    _
  $region41: #{_forward_impl.1} parent=0 // pred_fallthru
    _
  // Predicated region
  $region42: #{_forward_impl.1} parent=0 // pred_check
    _
  $region43: #{_forward_impl.1} parent=0 // pred_check_branch
    %42 = sbr.rel (0) target = $region45
  $region44: #{_forward_impl.1} parent=0 // pred_region
    _
  $region45: #{_forward_impl.1} parent=0 // pred_fallthru
    _
  // Predicated region
  $region46: #{_forward_impl.1} parent=0 // pred_check
    _
  $region47: #{_forward_impl.1} parent=0 // pred_check_branch
    %44 = sbr.rel (0) target = $region49
  $region48: #{_forward_impl.1} parent=0 // pred_region
    _
  $region49: #{_forward_impl.1} parent=0 // pred_fallthru
    _
  // Predicated region
  $region50: #{_forward_impl.1} parent=0 // pred_check
    _
  $region51: #{_forward_impl.1} parent=0 // pred_check_branch
    %46 = sbr.rel (0) target = $region53
  $region52: #{_forward_impl.1} parent=0 // pred_region
    _
  $region53: #{_forward_impl.1} parent=0 // pred_fallthru
    _
  // Predicated region
  $region54: #{_forward_impl.1} parent=0 // pred_check
    _
  $region55: #{_forward_impl.1} parent=0 // pred_check_branch
    %48 = sbr.rel (0) target = $region57
  $region56: #{_forward_impl.1} parent=0 // pred_region
    _
  $region57: #{_forward_impl.1} parent=0 // pred_fallthru
    _
  // Predicated region
  $region58: #{_forward_impl.1} parent=0 // pred_check
    _
  $region59: #{_forward_impl.1} parent=0 // pred_check_branch
    %50 = sbr.rel (0) target = $region61
  $region60: #{_forward_impl.1} parent=0 // pred_region
    _
  $region61: #{_forward_impl.1} parent=0 // pred_fallthru
    _
  // Predicated region
  $region62: #{_forward_impl.1} parent=0 // pred_check
    _
  $region63: #{_forward_impl.1} parent=0 // pred_check_branch
    %52 = sbr.rel (0) target = $region65
  $region64: #{_forward_impl.1} parent=0 // pred_region
    _
  $region65: #{_forward_impl.1} parent=0 // pred_fallthru
    _
  %v54 = vld [vmem:[%s0] sm:$0xf]
  %v55 = vld [vmem:[%s0 + $0x4] sm:$0xf]
  %v56 = vld [vmem:[%s0 + $0x8] sm:$0xf]
  %v57 = vld [vmem:[%s0 + $0xc] sm:$0xf]
  %v58 = vld [vmem:[%s0 + $0x10] sm:$0xf]
  %v59 = vld [vmem:[%s0 + $0x14] sm:$0xf]
  %v60 = vld [vmem:[%s0 + $0x18] sm:$0x1]
  %v61 = vld [vmem:[%s3] sm:$0xf]
  %v62 = vld [vmem:[%s3 + $0x4] sm:$0xf]
  %v63 = vld [vmem:[%s3 + $0x8] sm:$0xf]
  %v64 = vld [vmem:[%s3 + $0xc] sm:$0xf]
  %v65 = vld [vmem:[%s4] sm:$0x1]
  %v67 = vlaneseq
  %v68 = vshrl.u32 %v67, 7
  %v69 = vsub.s32 0, %v68
  %v70 = vrot.slane %v65, %v69
  %v79 = vunpack.c.l.b16 %v54
  %v80 = vunpack.c.l.b16 %v55
  %v81 = vunpack.c.l.b16 %v56
  %v82 = vunpack.c.l.b16 %v57
  %v83 = vunpack.c.l.b16 %v58
  %v84 = vunpack.c.l.b16 %v59
  %v85 = vunpack.c.l.b16 %v60
  %v86 = vpack.c.b16 %v80, %v79
  %v87 = vpack.c.b16 %v82, %v81
  %v88 = vpack.c.b16 %v84, %v83
  %v89 = vpack.c.b16 %v85, %v85
  %v94 = vunpack.c.l.b16 %v61
  %v95 = vunpack.c.l.b16 %v62
  %v96 = vunpack.c.l.b16 %v63
  %v97 = vunpack.c.l.b16 %v64
  %v98 = vpack.c.b16 %v95, %v94
  %v99 = vpack.c.b16 %v97, %v96
  %vm102 = vcmask 261120
  %v104 = vsel %vm102, %v86, 0
  %v107 = vsel %vm102, %v87, 0
  %v110 = vsel %vm102, %v88, 0
  %v113 = vsel %vm102, %v89, 0
  %115 = vmatprep.subr.bf16.mxu0 0
  %116 = vmatpush1.bf16.msra.mxu0 0
  %117 = vmatprep.subr.bf16.mxu0 0
  %118 = vmatpush1.bf16.msra.mxu0 0
  %119 = vmatprep.subr.bf16.mxu0 0
  %120 = vmatpush1.bf16.msra.mxu0 0
  %121 = vmatprep.subr.bf16.mxu0 0
  %122 = vmatpush1.bf16.msra.mxu0 0
  %123 = vmatprep.subr.bf16.mxu0 0
  %124 = vmatpush1.bf16.msra.mxu0 0
  %125 = vmatprep.subr.bf16.mxu0 0
  %126 = vmatpush1.bf16.msra.mxu0 0
  %127 = vmatprep.subr.bf16.mxu0 0
  %128 = vmatpush1.bf16.msra.mxu0 %v99
  %129 = vmatprep.subr.bf16.mxu0 0
  %130 = vmatpush1.bf16.msra.mxu0 %v98
  %131 = vmatprep.subr.bf16.mxu0 0
  %132 = vmatpush2.bf16.msra.mxu0 0
  %133 = vmatprep.subr.bf16.mxu0 0
  %134 = vmatpush2.bf16.msra.mxu0 0
  %135 = vmatprep.subr.bf16.mxu0 0
  %136 = vmatpush2.bf16.msra.mxu0 0
  %137 = vmatprep.subr.bf16.mxu0 0
  %138 = vmatpush2.bf16.msra.mxu0 0
  %139 = vmatprep.subr.bf16.mxu0 0
  %140 = vmatpush2.bf16.msra.mxu0 0
  %141 = vmatprep.subr.bf16.mxu0 0
  %142 = vmatpush2.bf16.msra.mxu0 0
  %143 = vmatprep.subr.bf16.mxu0 0
  %144 = vmatpush2.bf16.msra.mxu0 0
  %145 = vmatprep.subr.bf16.mxu0 0
  %146 = vmatpush2.bf16.msra.mxu0 0
  %147 = vmatprep.mubr.bf16.mxu0 0
  %148 = vmatmul.mubr.bf16.gmra.mxu0 %v104
  %v149 = vpop.f32.mrf.mxu0
  %v150 = vadd.f32 %v70, %v149
  %v151 = vpop.f32.mrf.mxu0
  %v152 = vpop.f32.mrf.mxu0
  %v153 = vadd.f32 %v70, %v152
  %v154 = vpop.f32.mrf.mxu0
  %155 = vmatprep.mubr.bf16.mxu0 0
  %156 = vmatmul.mubr.bf16.gmra.mxu0 %v107
  %v157 = vpop.f32.mrf.mxu0
  %v158 = vadd.f32 %v70, %v157
  %v159 = vpop.f32.mrf.mxu0
  %v160 = vpop.f32.mrf.mxu0
  %v161 = vadd.f32 %v70, %v160
  %v162 = vpop.f32.mrf.mxu0
  %163 = vmatprep.mubr.bf16.mxu0 0
  %164 = vmatmul.mubr.bf16.gmra.mxu0 %v110
  %v165 = vpop.f32.mrf.mxu0
  %v166 = vadd.f32 %v70, %v165
  %v167 = vpop.f32.mrf.mxu0
  %v168 = vpop.f32.mrf.mxu0
  %v169 = vadd.f32 %v70, %v168
  %v170 = vpop.f32.mrf.mxu0
  %171 = vmatprep.mubr.bf16.mxu0 0
  %172 = vmatmul.mubr.bf16.gmra.mxu0 %v113
  %v173 = vpop.f32.mrf.mxu0
  %v174 = vadd.f32 %v70, %v173
  %v175 = vpop.f32.mrf.mxu0
  %v176 = vpop.f32.mrf.mxu0
  %v177 = vpop.f32.mrf.mxu0
  %178 = vdwg.mxu0
  %v179 = vmax.f32 %v150, 0.0
  %v180 = vmax.f32 %v153, 0.0
  %v181 = vmax.f32 %v158, 0.0
  %v182 = vmax.f32 %v161, 0.0
  %v183 = vmax.f32 %v166, 0.0
  %v184 = vmax.f32 %v169, 0.0
  %v185 = vmax.f32 %v174, 0.0
  %v186 = vpack.c.bf16 %v180, %v179
  %v187 = vpack.c.bf16 %v182, %v181
  %v188 = vpack.c.bf16 %v184, %v183
  %v189 = vpack.c.bf16 %v185, %v185
  %v190 = vld [vmem:[%s2] sm:$0xf]
  %v191 = vld [vmem:[%s2 + $0x4] sm:$0x1]
  %v194 = vunpack.c.l.b16 %v190
  %v195 = vunpack.c.l.b16 %v191
  %v196 = vpack.c.b16 %v195, %v194
  %vm197 = vcmask 400384
  %v199 = vsel %vm197, %v196, 0
  %vm201 = vcmask 1040384
  %v202 = vsel 0, 4294967295, 65535
  %v203 = vsel %vm201, %v202, 0
  %v205 = vand.u32 %v189, %v203
  %207 = vmatprep.subr.bf16.mxu0 0
  %208 = vmatpush1.bf16.msra.mxu0 0
  %209 = vmatprep.subr.bf16.mxu0 0
  %210 = vmatpush1.bf16.msra.mxu0 0
  %211 = vmatprep.subr.bf16.mxu0 0
  %212 = vmatpush1.bf16.msra.mxu0 0
  %213 = vmatprep.subr.bf16.mxu0 0
  %214 = vmatpush1.bf16.msra.mxu0 0
  %215 = vmatprep.subr.bf16.mxu0 0
  %216 = vmatpush1.bf16.msra.mxu0 %v205
  %217 = vmatprep.subr.bf16.mxu0 0
  %218 = vmatpush1.bf16.msra.mxu0 %v188
  %219 = vmatprep.subr.bf16.mxu0 0
  %220 = vmatpush1.bf16.msra.mxu0 %v187
  %221 = vmatprep.subr.bf16.mxu0 0
  %222 = vmatpush1.bf16.msra.mxu0 %v186
  %223 = vmatprep.subr.bf16.mxu0 0
  %224 = vmatpush2.bf16.msra.mxu0 0
  %225 = vmatprep.subr.bf16.mxu0 0
  %226 = vmatpush2.bf16.msra.mxu0 0
  %227 = vmatprep.subr.bf16.mxu0 0
  %228 = vmatpush2.bf16.msra.mxu0 0
  %229 = vmatprep.subr.bf16.mxu0 0
  %230 = vmatpush2.bf16.msra.mxu0 0
  %231 = vmatprep.subr.bf16.mxu0 0
  %232 = vmatpush2.bf16.msra.mxu0 0
  %233 = vmatprep.subr.bf16.mxu0 0
  %234 = vmatpush2.bf16.msra.mxu0 0
  %235 = vmatprep.subr.bf16.mxu0 0
  %236 = vmatpush2.bf16.msra.mxu0 0
  %237 = vmatprep.subr.bf16.mxu0 0
  %238 = vmatpush2.bf16.msra.mxu0 0
  %239 = vmatprep.mubr.bf16.mxu0 0
  %240 = vmatmul.mubr.bf16.gmra.mxu0 %v199
  %v241 = vpop.f32.mrf.mxu0
  %v242 = vadd.f32 0.0, %v241
  %v243 = vpop.f32.mrf.mxu0
  %v244 = vpop.f32.mrf.mxu0
  %v245 = vadd.f32 0.0, %v244
  %v246 = vpop.f32.mrf.mxu0
  %247 = vdwg.mxu0
  %s248 = scalar_lea.vmem %s2, 8
  %v249 = vld [vmem:[%s248] sm:$0xf]
  %v250 = vld [vmem:[%s248 + $0x4] sm:$0x1]
  %v253 = vunpack.c.l.b16 %v249
  %v254 = vunpack.c.l.b16 %v250
  %v255 = vpack.c.b16 %v254, %v253
  %v257 = vsel %vm197, %v255, 0
  %259 = vmatprep.subr.bf16.mxu0 0
  %260 = vmatpush1.bf16.msra.mxu0 0
  %261 = vmatprep.subr.bf16.mxu0 0
  %262 = vmatpush1.bf16.msra.mxu0 0
  %263 = vmatprep.subr.bf16.mxu0 0
  %264 = vmatpush1.bf16.msra.mxu0 0
  %265 = vmatprep.subr.bf16.mxu0 0
  %266 = vmatpush1.bf16.msra.mxu0 0
  %267 = vmatprep.subr.bf16.mxu0 0
  %268 = vmatpush1.bf16.msra.mxu0 %v205
  %269 = vmatprep.subr.bf16.mxu0 0
  %270 = vmatpush1.bf16.msra.mxu0 %v188
  %271 = vmatprep.subr.bf16.mxu0 0
  %272 = vmatpush1.bf16.msra.mxu0 %v187
  %273 = vmatprep.subr.bf16.mxu0 0
  %274 = vmatpush1.bf16.msra.mxu0 %v186
  %275 = vmatprep.subr.bf16.mxu0 0
  %276 = vmatpush2.bf16.msra.mxu0 0
  %277 = vmatprep.subr.bf16.mxu0 0
  %278 = vmatpush2.bf16.msra.mxu0 0
  %279 = vmatprep.subr.bf16.mxu0 0
  %280 = vmatpush2.bf16.msra.mxu0 0
  %281 = vmatprep.subr.bf16.mxu0 0
  %282 = vmatpush2.bf16.msra.mxu0 0
  %283 = vmatprep.subr.bf16.mxu0 0
  %284 = vmatpush2.bf16.msra.mxu0 0
  %285 = vmatprep.subr.bf16.mxu0 0
  %286 = vmatpush2.bf16.msra.mxu0 0
  %287 = vmatprep.subr.bf16.mxu0 0
  %288 = vmatpush2.bf16.msra.mxu0 0
  %289 = vmatprep.subr.bf16.mxu0 0
  %290 = vmatpush2.bf16.msra.mxu0 0
  %291 = vmatprep.mubr.bf16.mxu0 0
  %292 = vmatmul.mubr.bf16.gmra.mxu0 %v257
  %v293 = vpop.f32.mrf.mxu0
  %v294 = vadd.f32 0.0, %v293
  %v295 = vpop.f32.mrf.mxu0
  %v296 = vpop.f32.mrf.mxu0
  %v297 = vadd.f32 0.0, %v296
  %v298 = vpop.f32.mrf.mxu0
  %299 = vdwg.mxu0
  %s300 = scalar_lea.vmem %s2, 16
  %v301 = vld [vmem:[%s300] sm:$0xf]
  %v302 = vld [vmem:[%s300 + $0x4] sm:$0x1]
  %v305 = vunpack.c.l.b16 %v301
  %v306 = vunpack.c.l.b16 %v302
  %v307 = vpack.c.b16 %v306, %v305
  %v309 = vsel %vm197, %v307, 0
  %311 = vmatprep.subr.bf16.mxu0 0
  %312 = vmatpush1.bf16.msra.mxu0 0
  %313 = vmatprep.subr.bf16.mxu0 0
  %314 = vmatpush1.bf16.msra.mxu0 0
  %315 = vmatprep.subr.bf16.mxu0 0
  %316 = vmatpush1.bf16.msra.mxu0 0
  %317 = vmatprep.subr.bf16.mxu0 0
  %318 = vmatpush1.bf16.msra.mxu0 0
  %319 = vmatprep.subr.bf16.mxu0 0
  %320 = vmatpush1.bf16.msra.mxu0 %v205
  %321 = vmatprep.subr.bf16.mxu0 0
  %322 = vmatpush1.bf16.msra.mxu0 %v188
  %323 = vmatprep.subr.bf16.mxu0 0
  %324 = vmatpush1.bf16.msra.mxu0 %v187
  %325 = vmatprep.subr.bf16.mxu0 0
  %326 = vmatpush1.bf16.msra.mxu0 %v186
  %327 = vmatprep.subr.bf16.mxu0 0
  %328 = vmatpush2.bf16.msra.mxu0 0
  %329 = vmatprep.subr.bf16.mxu0 0
  %330 = vmatpush2.bf16.msra.mxu0 0
  %331 = vmatprep.subr.bf16.mxu0 0
  %332 = vmatpush2.bf16.msra.mxu0 0
  %333 = vmatprep.subr.bf16.mxu0 0
  %334 = vmatpush2.bf16.msra.mxu0 0
  %335 = vmatprep.subr.bf16.mxu0 0
  %336 = vmatpush2.bf16.msra.mxu0 0
  %337 = vmatprep.subr.bf16.mxu0 0
  %338 = vmatpush2.bf16.msra.mxu0 0
  %339 = vmatprep.subr.bf16.mxu0 0
  %340 = vmatpush2.bf16.msra.mxu0 0
  %341 = vmatprep.subr.bf16.mxu0 0
  %342 = vmatpush2.bf16.msra.mxu0 0
  %343 = vmatprep.mubr.bf16.mxu0 0
  %344 = vmatmul.mubr.bf16.gmra.mxu0 %v309
  %v345 = vpop.f32.mrf.mxu0
  %v346 = vadd.f32 0.0, %v345
  %v347 = vpop.f32.mrf.mxu0
  %v348 = vpop.f32.mrf.mxu0
  %v349 = vadd.f32 0.0, %v348
  %v350 = vpop.f32.mrf.mxu0
  %351 = vdwg.mxu0
  %s352 = scalar_lea.vmem %s2, 24
  %v353 = vld [vmem:[%s352] sm:$0xf]
  %v354 = vld [vmem:[%s352 + $0x4] sm:$0x1]
  %v357 = vunpack.c.l.b16 %v353
  %v358 = vunpack.c.l.b16 %v354
  %v359 = vpack.c.b16 %v358, %v357
  %v361 = vsel %vm197, %v359, 0
  %363 = vmatprep.subr.bf16.mxu0 0
  %364 = vmatpush1.bf16.msra.mxu0 0
  %365 = vmatprep.subr.bf16.mxu0 0
  %366 = vmatpush1.bf16.msra.mxu0 0
  %367 = vmatprep.subr.bf16.mxu0 0
  %368 = vmatpush1.bf16.msra.mxu0 0
  %369 = vmatprep.subr.bf16.mxu0 0
  %370 = vmatpush1.bf16.msra.mxu0 0
  %371 = vmatprep.subr.bf16.mxu0 0
  %372 = vmatpush1.bf16.msra.mxu0 %v205
  %373 = vmatprep.subr.bf16.mxu0 0
  %374 = vmatpush1.bf16.msra.mxu0 %v188
  %375 = vmatprep.subr.bf16.mxu0 0
  %376 = vmatpush1.bf16.msra.mxu0 %v187
  %377 = vmatprep.subr.bf16.mxu0 0
  %378 = vmatpush1.bf16.msra.mxu0 %v186
  %379 = vmatprep.subr.bf16.mxu0 0
  %380 = vmatpush2.bf16.msra.mxu0 0
  %381 = vmatprep.subr.bf16.mxu0 0
  %382 = vmatpush2.bf16.msra.mxu0 0
  %383 = vmatprep.subr.bf16.mxu0 0
  %384 = vmatpush2.bf16.msra.mxu0 0
  %385 = vmatprep.subr.bf16.mxu0 0
  %386 = vmatpush2.bf16.msra.mxu0 0
  %387 = vmatprep.subr.bf16.mxu0 0
  %388 = vmatpush2.bf16.msra.mxu0 0
  %389 = vmatprep.subr.bf16.mxu0 0
  %390 = vmatpush2.bf16.msra.mxu0 0
  %391 = vmatprep.subr.bf16.mxu0 0
  %392 = vmatpush2.bf16.msra.mxu0 0
  %393 = vmatprep.subr.bf16.mxu0 0
  %394 = vmatpush2.bf16.msra.mxu0 0
  %395 = vmatprep.mubr.bf16.mxu0 0
  %396 = vmatmul.mubr.bf16.gmra.mxu0 %v361
  %v397 = vpop.f32.mrf.mxu0
  %v398 = vadd.f32 0.0, %v397
  %v399 = vpop.f32.mrf.mxu0
  %v400 = vpop.f32.mrf.mxu0
  %v401 = vadd.f32 0.0, %v400
  %v402 = vpop.f32.mrf.mxu0
  %403 = vdwg.mxu0
  %s404 = scalar_lea.vmem %s2, 32
  %v405 = vld [vmem:[%s404] sm:$0xf]
  %v406 = vld [vmem:[%s404 + $0x4] sm:$0x1]
  %v409 = vunpack.c.l.b16 %v405
  %v410 = vunpack.c.l.b16 %v406
  %v411 = vpack.c.b16 %v410, %v409
  %v413 = vsel %vm197, %v411, 0
  %415 = vmatprep.subr.bf16.mxu0 0
  %416 = vmatpush1.bf16.msra.mxu0 0
  %417 = vmatprep.subr.bf16.mxu0 0
  %418 = vmatpush1.bf16.msra.mxu0 0
  %419 = vmatprep.subr.bf16.mxu0 0
  %420 = vmatpush1.bf16.msra.mxu0 0
  %421 = vmatprep.subr.bf16.mxu0 0
  %422 = vmatpush1.bf16.msra.mxu0 0
  %423 = vmatprep.subr.bf16.mxu0 0
  %424 = vmatpush1.bf16.msra.mxu0 %v205
  %425 = vmatprep.subr.bf16.mxu0 0
  %426 = vmatpush1.bf16.msra.mxu0 %v188
  %427 = vmatprep.subr.bf16.mxu0 0
  %428 = vmatpush1.bf16.msra.mxu0 %v187
  %429 = vmatprep.subr.bf16.mxu0 0
  %430 = vmatpush1.bf16.msra.mxu0 %v186
  %431 = vmatprep.subr.bf16.mxu0 0
  %432 = vmatpush2.bf16.msra.mxu0 0
  %433 = vmatprep.subr.bf16.mxu0 0
  %434 = vmatpush2.bf16.msra.mxu0 0
  %435 = vmatprep.subr.bf16.mxu0 0
  %436 = vmatpush2.bf16.msra.mxu0 0
  %437 = vmatprep.subr.bf16.mxu0 0
  %438 = vmatpush2.bf16.msra.mxu0 0
  %439 = vmatprep.subr.bf16.mxu0 0
  %440 = vmatpush2.bf16.msra.mxu0 0
  %441 = vmatprep.subr.bf16.mxu0 0
  %442 = vmatpush2.bf16.msra.mxu0 0
  %443 = vmatprep.subr.bf16.mxu0 0
  %444 = vmatpush2.bf16.msra.mxu0 0
  %445 = vmatprep.subr.bf16.mxu0 0
  %446 = vmatpush2.bf16.msra.mxu0 0
  %447 = vmatprep.mubr.bf16.mxu0 0
  %448 = vmatmul.mubr.bf16.gmra.mxu0 %v413
  %v449 = vpop.f32.mrf.mxu0
  %v450 = vadd.f32 0.0, %v449
  %v451 = vpop.f32.mrf.mxu0
  %v452 = vpop.f32.mrf.mxu0
  %v453 = vadd.f32 0.0, %v452
  %v454 = vpop.f32.mrf.mxu0
  %455 = vdwg.mxu0
  %s456 = scalar_lea.vmem %s2, 40
  %v457 = vld [vmem:[%s456] sm:$0xf]
  %v458 = vld [vmem:[%s456 + $0x4] sm:$0x1]
  %v461 = vunpack.c.l.b16 %v457
  %v462 = vunpack.c.l.b16 %v458
  %v463 = vpack.c.b16 %v462, %v461
  %v465 = vsel %vm197, %v463, 0
  %467 = vmatprep.subr.bf16.mxu0 0
  %468 = vmatpush1.bf16.msra.mxu0 0
  %469 = vmatprep.subr.bf16.mxu0 0
  %470 = vmatpush1.bf16.msra.mxu0 0
  %471 = vmatprep.subr.bf16.mxu0 0
  %472 = vmatpush1.bf16.msra.mxu0 0
  %473 = vmatprep.subr.bf16.mxu0 0
  %474 = vmatpush1.bf16.msra.mxu0 0
  %475 = vmatprep.subr.bf16.mxu0 0
  %476 = vmatpush1.bf16.msra.mxu0 %v205
  %477 = vmatprep.subr.bf16.mxu0 0
  %478 = vmatpush1.bf16.msra.mxu0 %v188
  %479 = vmatprep.subr.bf16.mxu0 0
  %480 = vmatpush1.bf16.msra.mxu0 %v187
  %481 = vmatprep.subr.bf16.mxu0 0
  %482 = vmatpush1.bf16.msra.mxu0 %v186
  %483 = vmatprep.subr.bf16.mxu0 0
  %484 = vmatpush2.bf16.msra.mxu0 0
  %485 = vmatprep.subr.bf16.mxu0 0
  %486 = vmatpush2.bf16.msra.mxu0 0
  %487 = vmatprep.subr.bf16.mxu0 0
  %488 = vmatpush2.bf16.msra.mxu0 0
  %489 = vmatprep.subr.bf16.mxu0 0
  %490 = vmatpush2.bf16.msra.mxu0 0
  %491 = vmatprep.subr.bf16.mxu0 0
  %492 = vmatpush2.bf16.msra.mxu0 0
  %493 = vmatprep.subr.bf16.mxu0 0
  %494 = vmatpush2.bf16.msra.mxu0 0
  %495 = vmatprep.subr.bf16.mxu0 0
  %496 = vmatpush2.bf16.msra.mxu0 0
  %497 = vmatprep.subr.bf16.mxu0 0
  %498 = vmatpush2.bf16.msra.mxu0 0
  %499 = vmatprep.mubr.bf16.mxu0 0
  %500 = vmatmul.mubr.bf16.gmra.mxu0 %v465
  %v501 = vpop.f32.mrf.mxu0
  %v502 = vadd.f32 0.0, %v501
  %v503 = vpop.f32.mrf.mxu0
  %v504 = vpop.f32.mrf.mxu0
  %v505 = vadd.f32 0.0, %v504
  %v506 = vpop.f32.mrf.mxu0
  %507 = vdwg.mxu0
  %s508 = scalar_lea.vmem %s2, 48
  %v509 = vld [vmem:[%s508] sm:$0xf]
  %v510 = vld [vmem:[%s508 + $0x4] sm:$0x1]
  %v513 = vunpack.c.l.b16 %v509
  %v514 = vunpack.c.l.b16 %v510
  %v515 = vpack.c.b16 %v514, %v513
  %v517 = vsel %vm197, %v515, 0
  %519 = vmatprep.subr.bf16.mxu0 0
  %520 = vmatpush1.bf16.msra.mxu0 0
  %521 = vmatprep.subr.bf16.mxu0 0
  %522 = vmatpush1.bf16.msra.mxu0 0
  %523 = vmatprep.subr.bf16.mxu0 0
  %524 = vmatpush1.bf16.msra.mxu0 0
  %525 = vmatprep.subr.bf16.mxu0 0
  %526 = vmatpush1.bf16.msra.mxu0 0
  %527 = vmatprep.subr.bf16.mxu0 0
  %528 = vmatpush1.bf16.msra.mxu0 %v205
  %529 = vmatprep.subr.bf16.mxu0 0
  %530 = vmatpush1.bf16.msra.mxu0 %v188
  %531 = vmatprep.subr.bf16.mxu0 0
  %532 = vmatpush1.bf16.msra.mxu0 %v187
  %533 = vmatprep.subr.bf16.mxu0 0
  %534 = vmatpush1.bf16.msra.mxu0 %v186
  %535 = vmatprep.subr.bf16.mxu0 0
  %536 = vmatpush2.bf16.msra.mxu0 0
  %537 = vmatprep.subr.bf16.mxu0 0
  %538 = vmatpush2.bf16.msra.mxu0 0
  %539 = vmatprep.subr.bf16.mxu0 0
  %540 = vmatpush2.bf16.msra.mxu0 0
  %541 = vmatprep.subr.bf16.mxu0 0
  %542 = vmatpush2.bf16.msra.mxu0 0
  %543 = vmatprep.subr.bf16.mxu0 0
  %544 = vmatpush2.bf16.msra.mxu0 0
  %545 = vmatprep.subr.bf16.mxu0 0
  %546 = vmatpush2.bf16.msra.mxu0 0
  %547 = vmatprep.subr.bf16.mxu0 0
  %548 = vmatpush2.bf16.msra.mxu0 0
  %549 = vmatprep.subr.bf16.mxu0 0
  %550 = vmatpush2.bf16.msra.mxu0 0
  %551 = vmatprep.mubr.bf16.mxu0 0
  %552 = vmatmul.mubr.bf16.gmra.mxu0 %v517
  %v553 = vpop.f32.mrf.mxu0
  %v554 = vadd.f32 0.0, %v553
  %v555 = vpop.f32.mrf.mxu0
  %v556 = vpop.f32.mrf.mxu0
  %v557 = vadd.f32 0.0, %v556
  %v558 = vpop.f32.mrf.mxu0
  %559 = vdwg.mxu0
  %s560 = scalar_lea.vmem %s2, 56
  %v561 = vld [vmem:[%s560] sm:$0xf]
  %v562 = vld [vmem:[%s560 + $0x4] sm:$0x1]
  %v565 = vunpack.c.l.b16 %v561
  %v566 = vunpack.c.l.b16 %v562
  %v567 = vpack.c.b16 %v566, %v565
  %v569 = vsel %vm197, %v567, 0
  %571 = vmatprep.subr.bf16.mxu0 0
  %572 = vmatpush1.bf16.msra.mxu0 0
  %573 = vmatprep.subr.bf16.mxu0 0
  %574 = vmatpush1.bf16.msra.mxu0 0
  %575 = vmatprep.subr.bf16.mxu0 0
  %576 = vmatpush1.bf16.msra.mxu0 0
  %577 = vmatprep.subr.bf16.mxu0 0
  %578 = vmatpush1.bf16.msra.mxu0 0
  %579 = vmatprep.subr.bf16.mxu0 0
  %580 = vmatpush1.bf16.msra.mxu0 %v205
  %581 = vmatprep.subr.bf16.mxu0 0
  %582 = vmatpush1.bf16.msra.mxu0 %v188
  %583 = vmatprep.subr.bf16.mxu0 0
  %584 = vmatpush1.bf16.msra.mxu0 %v187
  %585 = vmatprep.subr.bf16.mxu0 0
  %586 = vmatpush1.bf16.msra.mxu0 %v186
  %587 = vmatprep.subr.bf16.mxu0 0
  %588 = vmatpush2.bf16.msra.mxu0 0
  %589 = vmatprep.subr.bf16.mxu0 0
  %590 = vmatpush2.bf16.msra.mxu0 0
  %591 = vmatprep.subr.bf16.mxu0 0
  %592 = vmatpush2.bf16.msra.mxu0 0
  %593 = vmatprep.subr.bf16.mxu0 0
  %594 = vmatpush2.bf16.msra.mxu0 0
  %595 = vmatprep.subr.bf16.mxu0 0
  %596 = vmatpush2.bf16.msra.mxu0 0
  %597 = vmatprep.subr.bf16.mxu0 0
  %598 = vmatpush2.bf16.msra.mxu0 0
  %599 = vmatprep.subr.bf16.mxu0 0
  %600 = vmatpush2.bf16.msra.mxu0 0
  %601 = vmatprep.subr.bf16.mxu0 0
  %602 = vmatpush2.bf16.msra.mxu0 0
  %603 = vmatprep.mubr.bf16.mxu0 0
  %604 = vmatmul.mubr.bf16.gmra.mxu0 %v569
  %v605 = vpop.f32.mrf.mxu0
  %v606 = vadd.f32 0.0, %v605
  %v607 = vpop.f32.mrf.mxu0
  %v608 = vpop.f32.mrf.mxu0
  %v609 = vadd.f32 0.0, %v608
  %v610 = vpop.f32.mrf.mxu0
  %611 = vdwg.mxu0
  %s612 = scalar_lea.vmem %s2, 64
  %v613 = vld [vmem:[%s612] sm:$0xf]
  %v614 = vld [vmem:[%s612 + $0x4] sm:$0x1]
  %v617 = vunpack.c.l.b16 %v613
  %v618 = vunpack.c.l.b16 %v614
  %v619 = vpack.c.b16 %v618, %v617
  %v621 = vsel %vm197, %v619, 0
  %623 = vmatprep.subr.bf16.mxu0 0
  %624 = vmatpush1.bf16.msra.mxu0 0
  %625 = vmatprep.subr.bf16.mxu0 0
  %626 = vmatpush1.bf16.msra.mxu0 0
  %627 = vmatprep.subr.bf16.mxu0 0
  %628 = vmatpush1.bf16.msra.mxu0 0
  %629 = vmatprep.subr.bf16.mxu0 0
  %630 = vmatpush1.bf16.msra.mxu0 0
  %631 = vmatprep.subr.bf16.mxu0 0
  %632 = vmatpush1.bf16.msra.mxu0 %v205
  %633 = vmatprep.subr.bf16.mxu0 0
  %634 = vmatpush1.bf16.msra.mxu0 %v188
  %635 = vmatprep.subr.bf16.mxu0 0
  %636 = vmatpush1.bf16.msra.mxu0 %v187
  %637 = vmatprep.subr.bf16.mxu0 0
  %638 = vmatpush1.bf16.msra.mxu0 %v186
  %639 = vmatprep.subr.bf16.mxu0 0
  %640 = vmatpush2.bf16.msra.mxu0 0
  %641 = vmatprep.subr.bf16.mxu0 0
  %642 = vmatpush2.bf16.msra.mxu0 0
  %643 = vmatprep.subr.bf16.mxu0 0
  %644 = vmatpush2.bf16.msra.mxu0 0
  %645 = vmatprep.subr.bf16.mxu0 0
  %646 = vmatpush2.bf16.msra.mxu0 0
  %647 = vmatprep.subr.bf16.mxu0 0
  %648 = vmatpush2.bf16.msra.mxu0 0
  %649 = vmatprep.subr.bf16.mxu0 0
  %650 = vmatpush2.bf16.msra.mxu0 0
  %651 = vmatprep.subr.bf16.mxu0 0
  %652 = vmatpush2.bf16.msra.mxu0 0
  %653 = vmatprep.subr.bf16.mxu0 0
  %654 = vmatpush2.bf16.msra.mxu0 0
  %655 = vmatprep.mubr.bf16.mxu0 0
  %656 = vmatmul.mubr.bf16.gmra.mxu0 %v621
  %v657 = vpop.f32.mrf.mxu0
  %v658 = vadd.f32 0.0, %v657
  %v659 = vpop.f32.mrf.mxu0
  %v660 = vpop.f32.mrf.mxu0
  %v661 = vadd.f32 0.0, %v660
  %v662 = vpop.f32.mrf.mxu0
  %663 = vdwg.mxu0
  %666 = vrot.lane.b32.xlu0 %v294, 32
  %v667 = vpop.permute.xlu0 %666
  %668 = vrot.lane.b32.xlu0 %v297, 32
  %v669 = vpop.permute.xlu0 %668
  %674 = vrot.lane.b32.xlu0 %v346, 64
  %v675 = vpop.permute.xlu0 %674
  %676 = vrot.lane.b32.xlu0 %v349, 64
  %v677 = vpop.permute.xlu0 %676
  %682 = vrot.lane.b32.xlu0 %v398, 96
  %v683 = vpop.permute.xlu0 %682
  %684 = vrot.lane.b32.xlu0 %v401, 96
  %v685 = vpop.permute.xlu0 %684
  %690 = vrot.lane.b32.xlu0 %v502, 32
  %v691 = vpop.permute.xlu0 %690
  %692 = vrot.lane.b32.xlu0 %v505, 32
  %v693 = vpop.permute.xlu0 %692
  %698 = vrot.lane.b32.xlu0 %v554, 64
  %v699 = vpop.permute.xlu0 %698
  %700 = vrot.lane.b32.xlu0 %v557, 64
  %v701 = vpop.permute.xlu0 %700
  %706 = vrot.lane.b32.xlu0 %v606, 96
  %v707 = vpop.permute.xlu0 %706
  %708 = vrot.lane.b32.xlu0 %v609, 96
  %v709 = vpop.permute.xlu0 %708
  %v712 = vsel %vm102, %v242, %v667
  %v713 = vsel %vm102, %v245, %v669
  %vm714 = vcmask 523264
  %v715 = vsel %vm714, %v712, %v675
  %v716 = vsel %vm714, %v713, %v677
  %vm717 = vcmask 785408
  %v718 = vsel %vm717, %v715, %v683
  %v719 = vsel %vm717, %v716, %v685
  %v720 = vsel %vm102, %v450, %v691
  %v721 = vsel %vm102, %v453, %v693
  %v722 = vsel %vm714, %v720, %v699
  %v723 = vsel %vm714, %v721, %v701
  %v724 = vsel %vm717, %v722, %v707
  %v725 = vsel %vm717, %v723, %v709
  %v726 = vpack.c.bf16 %v719, %v718
  %v727 = vpack.c.bf16 %v725, %v724
  %v728 = vpack.c.bf16 %v661, %v658
  %v729 = vld [vmem:[%s5] sm:$0xf]
  %v730 = vld [vmem:[%s5 + $0x4] sm:$0xf]
  %v731 = vld [vmem:[%s5 + $0x8] sm:$0xf]
  %v732 = vld [vmem:[%s5 + $0xc] sm:$0xf]
  %v733 = vld [vmem:[%s5 + $0x10] sm:$0xf]
  %v734 = vld [vmem:[%s5 + $0x14] sm:$0xf]
  %v735 = vld [vmem:[%s5 + $0x18] sm:$0xf]
  %v736 = vld [vmem:[%s5 + $0x1c] sm:$0xf]
  %v737 = vld [vmem:[%s5 + $0x20] sm:$0xf]
  %v738 = vld [vmem:[%s5 + $0x24] sm:$0xf]
  %v739 = vld [vmem:[%s5 + $0x28] sm:$0xf]
  %v740 = vld [vmem:[%s5 + $0x2c] sm:$0xf]
  %v741 = vld [vmem:[%s5 + $0x30] sm:$0xf]
  %v742 = vld [vmem:[%s5 + $0x34] sm:$0xf]
  %v743 = vld [vmem:[%s5 + $0x38] sm:$0xf]
  %v744 = vld [vmem:[%s5 + $0x3c] sm:$0xf]
  %v745 = vld [vmem:[%s5 + $0x40] sm:$0xf]
  %v746 = vld [vmem:[%s5 + $0x44] sm:$0xf]
  %v747 = vld [vmem:[%s5 + $0x48] sm:$0xf]
  %v748 = vld [vmem:[%s5 + $0x4c] sm:$0xf]
  %v749 = vld [vmem:[%s5 + $0x50] sm:$0xf]
  %v750 = vld [vmem:[%s5 + $0x54] sm:$0xf]
  %v751 = vld [vmem:[%s5 + $0x58] sm:$0xf]
  %v752 = vld [vmem:[%s5 + $0x5c] sm:$0xf]
  %v753 = vld [vmem:[%s5 + $0x60] sm:$0xf]
  %v754 = vld [vmem:[%s5 + $0x64] sm:$0xf]
  %v755 = vld [vmem:[%s5 + $0x68] sm:$0xf]
  %v756 = vld [vmem:[%s5 + $0x6c] sm:$0xf]
  %v757 = vld [vmem:[%s5 + $0x70] sm:$0xf]
  %v758 = vld [vmem:[%s5 + $0x74] sm:$0xf]
  %v759 = vld [vmem:[%s5 + $0x78] sm:$0xf]
  %v760 = vld [vmem:[%s5 + $0x7c] sm:$0xf]
  %v761 = vld [vmem:[%s5 + $0x80] sm:$0xf]
  %v762 = vld [vmem:[%s5 + $0x84] sm:$0xf]
  %v763 = vld [vmem:[%s5 + $0x88] sm:$0xf]
  %v764 = vld [vmem:[%s5 + $0x8c] sm:$0xf]
  %v765 = vld [vmem:[%s6] sm:$0x1]
  %v767 = vlaneseq
  %v768 = vshrl.u32 %v767, 7
  %v769 = vsub.s32 0, %v768
  %v770 = vrot.slane %v765, %v769
  %v808 = vunpack.c.l.b16 %v729
  %v809 = vunpack.c.l.b16 %v730
  %v810 = vunpack.c.l.b16 %v731
  %v811 = vunpack.c.l.b16 %v732
  %v812 = vunpack.c.l.b16 %v733
  %v813 = vunpack.c.l.b16 %v734
  %v814 = vunpack.c.l.b16 %v735
  %v815 = vunpack.c.l.b16 %v736
  %v816 = vunpack.c.l.b16 %v737
  %v817 = vunpack.c.l.b16 %v738
  %v818 = vunpack.c.l.b16 %v739
  %v819 = vunpack.c.l.b16 %v740
  %v820 = vunpack.c.l.b16 %v741
  %v821 = vunpack.c.l.b16 %v742
  %v822 = vunpack.c.l.b16 %v743
  %v823 = vunpack.c.l.b16 %v744
  %v824 = vunpack.c.l.b16 %v745
  %v825 = vunpack.c.l.b16 %v746
  %v826 = vunpack.c.l.b16 %v747
  %v827 = vunpack.c.l.b16 %v748
  %v828 = vunpack.c.l.b16 %v749
  %v829 = vunpack.c.l.b16 %v750
  %v830 = vunpack.c.l.b16 %v751
  %v831 = vunpack.c.l.b16 %v752
  %v832 = vunpack.c.l.b16 %v753
  %v833 = vunpack.c.l.b16 %v754
  %v834 = vunpack.c.l.b16 %v755
  %v835 = vunpack.c.l.b16 %v756
  %v836 = vunpack.c.l.b16 %v757
  %v837 = vunpack.c.l.b16 %v758
  %v838 = vunpack.c.l.b16 %v759
  %v839 = vunpack.c.l.b16 %v760
  %v840 = vunpack.c.l.b16 %v761
  %v841 = vunpack.c.l.b16 %v762
  %v842 = vunpack.c.l.b16 %v763
  %v843 = vunpack.c.l.b16 %v764
  %v844 = vpack.c.b16 %v809, %v808
  %v845 = vpack.c.b16 %v811, %v810
  %v846 = vpack.c.b16 %v813, %v812
  %v847 = vpack.c.b16 %v815, %v814
  %v848 = vpack.c.b16 %v817, %v816
  %v849 = vpack.c.b16 %v819, %v818
  %v850 = vpack.c.b16 %v821, %v820
  %v851 = vpack.c.b16 %v823, %v822
  %v852 = vpack.c.b16 %v825, %v824
  %v853 = vpack.c.b16 %v827, %v826
  %v854 = vpack.c.b16 %v829, %v828
  %v855 = vpack.c.b16 %v831, %v830
  %v856 = vpack.c.b16 %v833, %v832
  %v857 = vpack.c.b16 %v835, %v834
  %v858 = vpack.c.b16 %v837, %v836
  %v859 = vpack.c.b16 %v839, %v838
  %v860 = vpack.c.b16 %v841, %v840
  %v861 = vpack.c.b16 %v843, %v842
  %v881 = vsel %vm102, %v728, 0
  %883 = vmatprep.subr.bf16.mxu0 0
  %884 = vmatpush1.bf16.msra.mxu0 %v851
  %885 = vmatprep.subr.bf16.mxu0 0
  %886 = vmatpush1.bf16.msra.mxu0 %v850
  %887 = vmatprep.subr.bf16.mxu0 0
  %888 = vmatpush1.bf16.msra.mxu0 %v849
  %889 = vmatprep.subr.bf16.mxu0 0
  %890 = vmatpush1.bf16.msra.mxu0 %v848
  %891 = vmatprep.subr.bf16.mxu0 0
  %892 = vmatpush1.bf16.msra.mxu0 %v847
  %893 = vmatprep.subr.bf16.mxu0 0
  %894 = vmatpush1.bf16.msra.mxu0 %v846
  %895 = vmatprep.subr.bf16.mxu0 0
  %896 = vmatpush1.bf16.msra.mxu0 %v845
  %897 = vmatprep.subr.bf16.mxu0 0
  %898 = vmatpush1.bf16.msra.mxu0 %v844
  %899 = vmatprep.subr.bf16.mxu0 0
  %900 = vmatpush2.bf16.msra.mxu0 %v859
  %901 = vmatprep.subr.bf16.mxu0 0
  %902 = vmatpush2.bf16.msra.mxu0 %v858
  %903 = vmatprep.subr.bf16.mxu0 0
  %904 = vmatpush2.bf16.msra.mxu0 %v857
  %905 = vmatprep.subr.bf16.mxu0 0
  %906 = vmatpush2.bf16.msra.mxu0 %v856
  %907 = vmatprep.subr.bf16.mxu0 0
  %908 = vmatpush2.bf16.msra.mxu0 %v855
  %909 = vmatprep.subr.bf16.mxu0 0
  %910 = vmatpush2.bf16.msra.mxu0 %v854
  %911 = vmatprep.subr.bf16.mxu0 0
  %912 = vmatpush2.bf16.msra.mxu0 %v853
  %913 = vmatprep.subr.bf16.mxu0 0
  %914 = vmatpush2.bf16.msra.mxu0 %v852
  %915 = vmatprep.mubr.bf16.mxu0 %v727
  %916 = vmatmul.mubr.bf16.gmra.mxu0 %v726
  %v917 = vpop.f32.mrf.mxu0
  %v918 = vadd.f32 %v770, %v917
  %v919 = vpop.f32.mrf.mxu0
  %v920 = vpop.f32.mrf.mxu0
  %v921 = vadd.f32 %v770, %v920
  %v922 = vpop.f32.mrf.mxu0
  %923 = vdwg.mxu0
  %924 = vmatprep.subr.bf16.mxu0 0
  %925 = vmatpush1.bf16.msra.mxu0 0
  %926 = vmatprep.subr.bf16.mxu0 0
  %927 = vmatpush1.bf16.msra.mxu0 0
  %928 = vmatprep.subr.bf16.mxu0 0
  %929 = vmatpush1.bf16.msra.mxu0 0
  %930 = vmatprep.subr.bf16.mxu0 0
  %931 = vmatpush1.bf16.msra.mxu0 0
  %932 = vmatprep.subr.bf16.mxu0 0
  %933 = vmatpush1.bf16.msra.mxu0 0
  %934 = vmatprep.subr.bf16.mxu0 0
  %935 = vmatpush1.bf16.msra.mxu0 0
  %936 = vmatprep.subr.bf16.mxu0 0
  %937 = vmatpush1.bf16.msra.mxu0 %v861
  %938 = vmatprep.subr.bf16.mxu0 0
  %939 = vmatpush1.bf16.msra.mxu0 %v860
  %940 = vmatprep.subr.bf16.mxu0 0
  %941 = vmatpush2.bf16.msra.mxu0 0
  %942 = vmatprep.subr.bf16.mxu0 0
  %943 = vmatpush2.bf16.msra.mxu0 0
  %944 = vmatprep.subr.bf16.mxu0 0
  %945 = vmatpush2.bf16.msra.mxu0 0
  %946 = vmatprep.subr.bf16.mxu0 0
  %947 = vmatpush2.bf16.msra.mxu0 0
  %948 = vmatprep.subr.bf16.mxu0 0
  %949 = vmatpush2.bf16.msra.mxu0 0
  %950 = vmatprep.subr.bf16.mxu0 0
  %951 = vmatpush2.bf16.msra.mxu0 0
  %952 = vmatprep.subr.bf16.mxu0 0
  %953 = vmatpush2.bf16.msra.mxu0 0
  %954 = vmatprep.subr.bf16.mxu0 0
  %955 = vmatpush2.bf16.msra.mxu0 0
  %956 = vmatprep.mubr.bf16.mxu0 0
  %957 = vmatmul.mubr.bf16.gmra.mxu0 %v881
  %v958 = vpop.f32.mrf.mxu0
  %v959 = vadd.f32 %v918, %v958
  %v960 = vpop.f32.mrf.mxu0
  %v961 = vpop.f32.mrf.mxu0
  %v962 = vadd.f32 %v921, %v961
  %v963 = vpop.f32.mrf.mxu0
  %964 = vdwg.mxu0
  %v965 = vmax.f32 %v959, 0.0
  %v966 = vmax.f32 %v962, 0.0
  %v968 = vrot.slane %v965, 1
  %969 = vrot.lane.b32.xlu0 %v968, 64
  %v970 = vpop.permute.xlu0 %969
  %v972 = vrot.slane %v965, 2
  %v974 = vrot.slane %v965, 3
  %975 = vrot.lane.b32.xlu0 %v974, 64
  %v976 = vpop.permute.xlu0 %975
  %v978 = vrot.slane %v965, 4
  %v980 = vrot.slane %v965, 5
  %981 = vrot.lane.b32.xlu0 %v980, 64
  %v982 = vpop.permute.xlu0 %981
  %v984 = vrot.slane %v965, 6
  %v986 = vrot.slane %v965, 7
  %987 = vrot.lane.b32.xlu0 %v986, 64
  %v988 = vpop.permute.xlu0 %987
  %v990 = vsel %vm714, %v965, %v970
  %v991 = vsel %vm714, %v972, %v976
  %v992 = vsel %vm714, %v978, %v982
  %v993 = vsel %vm714, %v984, %v988
  %v994 = vpack.c.bf16 %v990, %v990
  %v995 = vpack.c.bf16 %v991, %v991
  %v996 = vpack.c.bf16 %v992, %v992
  %v997 = vpack.c.bf16 %v993, %v993
  %v998 = vpack.c.bf16 %v966, %v966
  %v999 = vld [vmem:[%s7] sm:$0xf]
  %v1000 = vld [vmem:[%s7 + $0x4] sm:$0xf]
  %v1001 = vld [vmem:[%s7 + $0x8] sm:$0xf]
  %v1002 = vld [vmem:[%s7 + $0xc] sm:$0xf]
  %v1003 = vld [vmem:[%s7 + $0x10] sm:$0xf]
  %v1004 = vld [vmem:[%s7 + $0x14] sm:$0xf]
  %v1005 = vld [vmem:[%s7 + $0x18] sm:$0xf]
  %v1006 = vld [vmem:[%s7 + $0x1c] sm:$0xf]
  %v1007 = vld [vmem:[%s7 + $0x20] sm:$0xf]
  %v1008 = vld [vmem:[%s7 + $0x24] sm:$0xf]
  %v1009 = vld [vmem:[%s7 + $0x28] sm:$0xf]
  %v1010 = vld [vmem:[%s7 + $0x2c] sm:$0xf]
  %v1011 = vld [vmem:[%s7 + $0x30] sm:$0xf]
  %v1012 = vld [vmem:[%s7 + $0x34] sm:$0xf]
  %v1013 = vld [vmem:[%s7 + $0x38] sm:$0xf]
  %v1014 = vld [vmem:[%s7 + $0x3c] sm:$0xf]
  %v1015 = vld [vmem:[%s7 + $0x40] sm:$0xf]
  %v1016 = vld [vmem:[%s7 + $0x44] sm:$0xf]
  %v1017 = vld [vmem:[%s7 + $0x48] sm:$0xf]
  %v1018 = vld [vmem:[%s7 + $0x4c] sm:$0xf]
  %v1019 = vld [vmem:[%s7 + $0x50] sm:$0xf]
  %v1020 = vld [vmem:[%s7 + $0x54] sm:$0xf]
  %v1021 = vld [vmem:[%s7 + $0x58] sm:$0xf]
  %v1022 = vld [vmem:[%s7 + $0x5c] sm:$0xf]
  %v1023 = vld [vmem:[%s7 + $0x60] sm:$0xf]
  %v1024 = vld [vmem:[%s7 + $0x64] sm:$0xf]
  %v1025 = vld [vmem:[%s7 + $0x68] sm:$0xf]
  %v1026 = vld [vmem:[%s7 + $0x6c] sm:$0xf]
  %v1027 = vld [vmem:[%s7 + $0x70] sm:$0xf]
  %v1028 = vld [vmem:[%s7 + $0x74] sm:$0xf]
  %v1029 = vld [vmem:[%s7 + $0x78] sm:$0xf]
  %v1030 = vld [vmem:[%s7 + $0x7c] sm:$0xf]
  %v1031 = vld [vmem:[%s7 + $0x80] sm:$0xf]
  %v1032 = vld [vmem:[%s7 + $0x84] sm:$0xf]
  %v1033 = vld [vmem:[%s7 + $0x88] sm:$0xf]
  %v1034 = vld [vmem:[%s7 + $0x8c] sm:$0xf]
  %v1035 = vld [vmem:[%s7 + $0x90] sm:$0xf]
  %v1036 = vld [vmem:[%s7 + $0x94] sm:$0xf]
  %v1037 = vld [vmem:[%s7 + $0x98] sm:$0xf]
  %v1038 = vld [vmem:[%s7 + $0x9c] sm:$0xf]
  %v1039 = vld [vmem:[%s7 + $0xa0] sm:$0xf]
  %v1040 = vld [vmem:[%s7 + $0xa4] sm:$0xf]
  %v1041 = vld [vmem:[%s7 + $0xa8] sm:$0xf]
  %v1042 = vld [vmem:[%s7 + $0xac] sm:$0xf]
  %v1043 = vld [vmem:[%s7 + $0xb0] sm:$0xf]
  %v1044 = vld [vmem:[%s7 + $0xb4] sm:$0xf]
  %v1045 = vld [vmem:[%s7 + $0xb8] sm:$0xf]
  %v1046 = vld [vmem:[%s7 + $0xbc] sm:$0xf]
  %v1047 = vld [vmem:[%s7 + $0xc0] sm:$0xf]
  %v1048 = vld [vmem:[%s7 + $0xc4] sm:$0xf]
  %v1049 = vld [vmem:[%s7 + $0xc8] sm:$0xf]
  %v1050 = vld [vmem:[%s7 + $0xcc] sm:$0xf]
  %v1051 = vld [vmem:[%s7 + $0xd0] sm:$0xf]
  %v1052 = vld [vmem:[%s7 + $0xd4] sm:$0xf]
  %v1053 = vld [vmem:[%s7 + $0xd8] sm:$0xf]
  %v1054 = vld [vmem:[%s7 + $0xdc] sm:$0xf]
  %v1055 = vld [vmem:[%s7 + $0xe0] sm:$0xf]
  %v1056 = vld [vmem:[%s7 + $0xe4] sm:$0xf]
  %v1057 = vld [vmem:[%s7 + $0xe8] sm:$0xf]
  %v1058 = vld [vmem:[%s7 + $0xec] sm:$0xf]
  %v1059 = vld [vmem:[%s7 + $0xf0] sm:$0xf]
  %v1060 = vld [vmem:[%s7 + $0xf4] sm:$0xf]
  %v1061 = vld [vmem:[%s7 + $0xf8] sm:$0xf]
  %v1062 = vld [vmem:[%s7 + $0xfc] sm:$0xf]
  %v1063 = vld [vmem:[%s7 + $0x100] sm:$0xf]
  %v1064 = vld [vmem:[%s7 + $0x104] sm:$0xf]
  %v1065 = vld [vmem:[%s7 + $0x108] sm:$0xf]
  %v1066 = vld [vmem:[%s7 + $0x10c] sm:$0xf]
  %v1067 = vld [vmem:[%s7 + $0x110] sm:$0xf]
  %v1068 = vld [vmem:[%s7 + $0x114] sm:$0xf]
  %v1069 = vld [vmem:[%s7 + $0x118] sm:$0xf]
  %v1070 = vld [vmem:[%s7 + $0x11c] sm:$0xf]
  %v1071 = vld [vmem:[%s8] sm:$0x1]
  %v1144 = vunpack.c.l.b16 %v999
  %v1145 = vunpack.c.l.b16 %v1000
  %v1146 = vunpack.c.l.b16 %v1001
  %v1147 = vunpack.c.l.b16 %v1002
  %v1148 = vunpack.c.l.b16 %v1003
  %v1149 = vunpack.c.l.b16 %v1004
  %v1150 = vunpack.c.l.b16 %v1005
  %v1151 = vunpack.c.l.b16 %v1006
  %v1152 = vunpack.c.l.b16 %v1007
  %v1153 = vunpack.c.l.b16 %v1008
  %v1154 = vunpack.c.l.b16 %v1009
  %v1155 = vunpack.c.l.b16 %v1010
  %v1156 = vunpack.c.l.b16 %v1011
  %v1157 = vunpack.c.l.b16 %v1012
  %v1158 = vunpack.c.l.b16 %v1013
  %v1159 = vunpack.c.l.b16 %v1014
  %v1160 = vunpack.c.l.b16 %v1015
  %v1161 = vunpack.c.l.b16 %v1016
  %v1162 = vunpack.c.l.b16 %v1017
  %v1163 = vunpack.c.l.b16 %v1018
  %v1164 = vunpack.c.l.b16 %v1019
  %v1165 = vunpack.c.l.b16 %v1020
  %v1166 = vunpack.c.l.b16 %v1021
  %v1167 = vunpack.c.l.b16 %v1022
  %v1168 = vunpack.c.l.b16 %v1023
  %v1169 = vunpack.c.l.b16 %v1024
  %v1170 = vunpack.c.l.b16 %v1025
  %v1171 = vunpack.c.l.b16 %v1026
  %v1172 = vunpack.c.l.b16 %v1027
  %v1173 = vunpack.c.l.b16 %v1028
  %v1174 = vunpack.c.l.b16 %v1029
  %v1175 = vunpack.c.l.b16 %v1030
  %v1176 = vunpack.c.l.b16 %v1031
  %v1177 = vunpack.c.l.b16 %v1032
  %v1178 = vunpack.c.l.b16 %v1033
  %v1179 = vunpack.c.l.b16 %v1034
  %v1180 = vunpack.c.l.b16 %v1035
  %v1181 = vunpack.c.l.b16 %v1036
  %v1182 = vunpack.c.l.b16 %v1037
  %v1183 = vunpack.c.l.b16 %v1038
  %v1184 = vunpack.c.l.b16 %v1039
  %v1185 = vunpack.c.l.b16 %v1040
  %v1186 = vunpack.c.l.b16 %v1041
  %v1187 = vunpack.c.l.b16 %v1042
  %v1188 = vunpack.c.l.b16 %v1043
  %v1189 = vunpack.c.l.b16 %v1044
  %v1190 = vunpack.c.l.b16 %v1045
  %v1191 = vunpack.c.l.b16 %v1046
  %v1192 = vunpack.c.l.b16 %v1047
  %v1193 = vunpack.c.l.b16 %v1048
  %v1194 = vunpack.c.l.b16 %v1049
  %v1195 = vunpack.c.l.b16 %v1050
  %v1196 = vunpack.c.l.b16 %v1051
  %v1197 = vunpack.c.l.b16 %v1052
  %v1198 = vunpack.c.l.b16 %v1053
  %v1199 = vunpack.c.l.b16 %v1054
  %v1200 = vunpack.c.l.b16 %v1055
  %v1201 = vunpack.c.l.b16 %v1056
  %v1202 = vunpack.c.l.b16 %v1057
  %v1203 = vunpack.c.l.b16 %v1058
  %v1204 = vunpack.c.l.b16 %v1059
  %v1205 = vunpack.c.l.b16 %v1060
  %v1206 = vunpack.c.l.b16 %v1061
  %v1207 = vunpack.c.l.b16 %v1062
  %v1208 = vunpack.c.l.b16 %v1063
  %v1209 = vunpack.c.l.b16 %v1064
  %v1210 = vunpack.c.l.b16 %v1065
  %v1211 = vunpack.c.l.b16 %v1066
  %v1212 = vunpack.c.l.b16 %v1067
  %v1213 = vunpack.c.l.b16 %v1068
  %v1214 = vunpack.c.l.b16 %v1069
  %v1215 = vunpack.c.l.b16 %v1070
  %v1216 = vpack.c.b16 %v1145, %v1144
  %v1217 = vpack.c.b16 %v1147, %v1146
  %v1218 = vpack.c.b16 %v1149, %v1148
  %v1219 = vpack.c.b16 %v1151, %v1150
  %v1220 = vpack.c.b16 %v1153, %v1152
  %v1221 = vpack.c.b16 %v1155, %v1154
  %v1222 = vpack.c.b16 %v1157, %v1156
  %v1223 = vpack.c.b16 %v1159, %v1158
  %v1224 = vpack.c.b16 %v1161, %v1160
  %v1225 = vpack.c.b16 %v1163, %v1162
  %v1226 = vpack.c.b16 %v1165, %v1164
  %v1227 = vpack.c.b16 %v1167, %v1166
  %v1228 = vpack.c.b16 %v1169, %v1168
  %v1229 = vpack.c.b16 %v1171, %v1170
  %v1230 = vpack.c.b16 %v1173, %v1172
  %v1231 = vpack.c.b16 %v1175, %v1174
  %v1232 = vpack.c.b16 %v1177, %v1176
  %v1233 = vpack.c.b16 %v1179, %v1178
  %v1234 = vpack.c.b16 %v1181, %v1180
  %v1235 = vpack.c.b16 %v1183, %v1182
  %v1236 = vpack.c.b16 %v1185, %v1184
  %v1237 = vpack.c.b16 %v1187, %v1186
  %v1238 = vpack.c.b16 %v1189, %v1188
  %v1239 = vpack.c.b16 %v1191, %v1190
  %v1240 = vpack.c.b16 %v1193, %v1192
  %v1241 = vpack.c.b16 %v1195, %v1194
  %v1242 = vpack.c.b16 %v1197, %v1196
  %v1243 = vpack.c.b16 %v1199, %v1198
  %v1244 = vpack.c.b16 %v1201, %v1200
  %v1245 = vpack.c.b16 %v1203, %v1202
  %v1246 = vpack.c.b16 %v1205, %v1204
  %v1247 = vpack.c.b16 %v1207, %v1206
  %v1248 = vpack.c.b16 %v1209, %v1208
  %v1249 = vpack.c.b16 %v1211, %v1210
  %v1250 = vpack.c.b16 %v1213, %v1212
  %v1251 = vpack.c.b16 %v1215, %v1214
  %v1289 = vsel %vm714, %v998, 0
  %1291 = vmatprep.subr.bf16.mxu0 0
  %1292 = vmatpush1.bf16.msra.mxu0 %v1223
  %1293 = vmatprep.subr.bf16.mxu0 0
  %1294 = vmatpush1.bf16.msra.mxu0 %v1222
  %1295 = vmatprep.subr.bf16.mxu0 0
  %1296 = vmatpush1.bf16.msra.mxu0 %v1221
  %1297 = vmatprep.subr.bf16.mxu0 0
  %1298 = vmatpush1.bf16.msra.mxu0 %v1220
  %1299 = vmatprep.subr.bf16.mxu0 0
  %1300 = vmatpush1.bf16.msra.mxu0 %v1219
  %1301 = vmatprep.subr.bf16.mxu0 0
  %1302 = vmatpush1.bf16.msra.mxu0 %v1218
  %1303 = vmatprep.subr.bf16.mxu0 0
  %1304 = vmatpush1.bf16.msra.mxu0 %v1217
  %1305 = vmatprep.subr.bf16.mxu0 0
  %1306 = vmatpush1.bf16.msra.mxu0 %v1216
  %1307 = vmatprep.subr.bf16.mxu0 0
  %1308 = vmatpush2.bf16.msra.mxu0 %v1231
  %1309 = vmatprep.subr.bf16.mxu0 0
  %1310 = vmatpush2.bf16.msra.mxu0 %v1230
  %1311 = vmatprep.subr.bf16.mxu0 0
  %1312 = vmatpush2.bf16.msra.mxu0 %v1229
  %1313 = vmatprep.subr.bf16.mxu0 0
  %1314 = vmatpush2.bf16.msra.mxu0 %v1228
  %1315 = vmatprep.subr.bf16.mxu0 0
  %1316 = vmatpush2.bf16.msra.mxu0 %v1227
  %1317 = vmatprep.subr.bf16.mxu0 0
  %1318 = vmatpush2.bf16.msra.mxu0 %v1226
  %1319 = vmatprep.subr.bf16.mxu0 0
  %1320 = vmatpush2.bf16.msra.mxu0 %v1225
  %1321 = vmatprep.subr.bf16.mxu0 0
  %1322 = vmatpush2.bf16.msra.mxu0 %v1224
  %1323 = vmatprep.mubr.bf16.mxu0 %v995
  %1324 = vmatmul.mubr.bf16.gmra.mxu0 %v994
  %v1325 = vpop.f32.mrf.mxu0
  %v1326 = vadd.f32 %v1071, %v1325
  %v1327 = vpop.f32.mrf.mxu0
  %v1328 = vpop.f32.mrf.mxu0
  %v1329 = vpop.f32.mrf.mxu0
  %1330 = vdwg.mxu0
  %1331 = vmatprep.subr.bf16.mxu0 0
  %1332 = vmatpush1.bf16.msra.mxu0 %v1239
  %1333 = vmatprep.subr.bf16.mxu0 0
  %1334 = vmatpush1.bf16.msra.mxu0 %v1238
  %1335 = vmatprep.subr.bf16.mxu0 0
  %1336 = vmatpush1.bf16.msra.mxu0 %v1237
  %1337 = vmatprep.subr.bf16.mxu0 0
  %1338 = vmatpush1.bf16.msra.mxu0 %v1236
  %1339 = vmatprep.subr.bf16.mxu0 0
  %1340 = vmatpush1.bf16.msra.mxu0 %v1235
  %1341 = vmatprep.subr.bf16.mxu0 0
  %1342 = vmatpush1.bf16.msra.mxu0 %v1234
  %1343 = vmatprep.subr.bf16.mxu0 0
  %1344 = vmatpush1.bf16.msra.mxu0 %v1233
  %1345 = vmatprep.subr.bf16.mxu0 0
  %1346 = vmatpush1.bf16.msra.mxu0 %v1232
  %1347 = vmatprep.subr.bf16.mxu0 0
  %1348 = vmatpush2.bf16.msra.mxu0 %v1247
  %1349 = vmatprep.subr.bf16.mxu0 0
  %1350 = vmatpush2.bf16.msra.mxu0 %v1246
  %1351 = vmatprep.subr.bf16.mxu0 0
  %1352 = vmatpush2.bf16.msra.mxu0 %v1245
  %1353 = vmatprep.subr.bf16.mxu0 0
  %1354 = vmatpush2.bf16.msra.mxu0 %v1244
  %1355 = vmatprep.subr.bf16.mxu0 0
  %1356 = vmatpush2.bf16.msra.mxu0 %v1243
  %1357 = vmatprep.subr.bf16.mxu0 0
  %1358 = vmatpush2.bf16.msra.mxu0 %v1242
  %1359 = vmatprep.subr.bf16.mxu0 0
  %1360 = vmatpush2.bf16.msra.mxu0 %v1241
  %1361 = vmatprep.subr.bf16.mxu0 0
  %1362 = vmatpush2.bf16.msra.mxu0 %v1240
  %1363 = vmatprep.mubr.bf16.mxu0 %v997
  %1364 = vmatmul.mubr.bf16.gmra.mxu0 %v996
  %v1365 = vpop.f32.mrf.mxu0
  %v1366 = vadd.f32 %v1326, %v1365
  %v1367 = vpop.f32.mrf.mxu0
  %v1368 = vpop.f32.mrf.mxu0
  %v1369 = vpop.f32.mrf.mxu0
  %1370 = vdwg.mxu0
  %1371 = vmatprep.subr.bf16.mxu0 0
  %1372 = vmatpush1.bf16.msra.mxu0 0
  %1373 = vmatprep.subr.bf16.mxu0 0
  %1374 = vmatpush1.bf16.msra.mxu0 0
  %1375 = vmatprep.subr.bf16.mxu0 0
  %1376 = vmatpush1.bf16.msra.mxu0 0
  %1377 = vmatprep.subr.bf16.mxu0 0
  %1378 = vmatpush1.bf16.msra.mxu0 0
  %1379 = vmatprep.subr.bf16.mxu0 0
  %1380 = vmatpush1.bf16.msra.mxu0 %v1251
  %1381 = vmatprep.subr.bf16.mxu0 0
  %1382 = vmatpush1.bf16.msra.mxu0 %v1250
  %1383 = vmatprep.subr.bf16.mxu0 0
  %1384 = vmatpush1.bf16.msra.mxu0 %v1249
  %1385 = vmatprep.subr.bf16.mxu0 0
  %1386 = vmatpush1.bf16.msra.mxu0 %v1248
  %1387 = vmatprep.subr.bf16.mxu0 0
  %1388 = vmatpush2.bf16.msra.mxu0 0
  %1389 = vmatprep.subr.bf16.mxu0 0
  %1390 = vmatpush2.bf16.msra.mxu0 0
  %1391 = vmatprep.subr.bf16.mxu0 0
  %1392 = vmatpush2.bf16.msra.mxu0 0
  %1393 = vmatprep.subr.bf16.mxu0 0
  %1394 = vmatpush2.bf16.msra.mxu0 0
  %1395 = vmatprep.subr.bf16.mxu0 0
  %1396 = vmatpush2.bf16.msra.mxu0 0
  %1397 = vmatprep.subr.bf16.mxu0 0
  %1398 = vmatpush2.bf16.msra.mxu0 0
  %1399 = vmatprep.subr.bf16.mxu0 0
  %1400 = vmatpush2.bf16.msra.mxu0 0
  %1401 = vmatprep.subr.bf16.mxu0 0
  %1402 = vmatpush2.bf16.msra.mxu0 0
  %1403 = vmatprep.mubr.bf16.mxu0 0
  %1404 = vmatmul.mubr.bf16.gmra.mxu0 %v1289
  %v1405 = vpop.f32.mrf.mxu0
  %v1406 = vadd.f32 %v1366, %v1405
  %v1407 = vpop.f32.mrf.mxu0
  %v1408 = vpop.f32.mrf.mxu0
  %v1409 = vpop.f32.mrf.mxu0
  %1410 = vdwg.mxu0
  %s1411 = scalar_lea.vmem %s0, 28
  %v1412 = vld [vmem:[%s1411] sm:$0xf]
  %v1413 = vld [vmem:[%s1411 + $0x4] sm:$0xf]
  %v1414 = vld [vmem:[%s1411 + $0x8] sm:$0xf]
  %v1415 = vld [vmem:[%s1411 + $0xc] sm:$0xf]
  %v1416 = vld [vmem:[%s1411 + $0x10] sm:$0xf]
  %v1417 = vld [vmem:[%s1411 + $0x14] sm:$0xf]
  %v1418 = vld [vmem:[%s1411 + $0x18] sm:$0x1]
  %v1426 = vunpack.c.l.b16 %v1412
  %v1427 = vunpack.c.l.b16 %v1413
  %v1428 = vunpack.c.l.b16 %v1414
  %v1429 = vunpack.c.l.b16 %v1415
  %v1430 = vunpack.c.l.b16 %v1416
  %v1431 = vunpack.c.l.b16 %v1417
  %v1432 = vunpack.c.l.b16 %v1418
  %v1433 = vpack.c.b16 %v1427, %v1426
  %v1434 = vpack.c.b16 %v1429, %v1428
  %v1435 = vpack.c.b16 %v1431, %v1430
  %v1436 = vpack.c.b16 %v1432, %v1432
  %v1438 = vsel %vm102, %v1433, 0
  %v1441 = vsel %vm102, %v1434, 0
  %v1444 = vsel %vm102, %v1435, 0
  %v1447 = vsel %vm102, %v1436, 0
  %1449 = vmatprep.subr.bf16.mxu0 0
  %1450 = vmatpush1.bf16.msra.mxu0 0
  %1451 = vmatprep.subr.bf16.mxu0 0
  %1452 = vmatpush1.bf16.msra.mxu0 0
  %1453 = vmatprep.subr.bf16.mxu0 0
  %1454 = vmatpush1.bf16.msra.mxu0 0
  %1455 = vmatprep.subr.bf16.mxu0 0
  %1456 = vmatpush1.bf16.msra.mxu0 0
  %1457 = vmatprep.subr.bf16.mxu0 0
  %1458 = vmatpush1.bf16.msra.mxu0 0
  %1459 = vmatprep.subr.bf16.mxu0 0
  %1460 = vmatpush1.bf16.msra.mxu0 0
  %1461 = vmatprep.subr.bf16.mxu0 0
  %1462 = vmatpush1.bf16.msra.mxu0 %v99
  %1463 = vmatprep.subr.bf16.mxu0 0
  %1464 = vmatpush1.bf16.msra.mxu0 %v98
  %1465 = vmatprep.subr.bf16.mxu0 0
  %1466 = vmatpush2.bf16.msra.mxu0 0
  %1467 = vmatprep.subr.bf16.mxu0 0
  %1468 = vmatpush2.bf16.msra.mxu0 0
  %1469 = vmatprep.subr.bf16.mxu0 0
  %1470 = vmatpush2.bf16.msra.mxu0 0
  %1471 = vmatprep.subr.bf16.mxu0 0
  %1472 = vmatpush2.bf16.msra.mxu0 0
  %1473 = vmatprep.subr.bf16.mxu0 0
  %1474 = vmatpush2.bf16.msra.mxu0 0
  %1475 = vmatprep.subr.bf16.mxu0 0
  %1476 = vmatpush2.bf16.msra.mxu0 0
  %1477 = vmatprep.subr.bf16.mxu0 0
  %1478 = vmatpush2.bf16.msra.mxu0 0
  %1479 = vmatprep.subr.bf16.mxu0 0
  %1480 = vmatpush2.bf16.msra.mxu0 0
  %1481 = vmatprep.mubr.bf16.mxu0 0
  %1482 = vmatmul.mubr.bf16.gmra.mxu0 %v1438
  %v1483 = vpop.f32.mrf.mxu0
  %v1484 = vadd.f32 %v70, %v1483
  %v1485 = vpop.f32.mrf.mxu0
  %v1486 = vpop.f32.mrf.mxu0
  %v1487 = vadd.f32 %v70, %v1486
  %v1488 = vpop.f32.mrf.mxu0
  %1489 = vmatprep.mubr.bf16.mxu0 0
  %1490 = vmatmul.mubr.bf16.gmra.mxu0 %v1441
  %v1491 = vpop.f32.mrf.mxu0
  %v1492 = vadd.f32 %v70, %v1491
  %v1493 = vpop.f32.mrf.mxu0
  %v1494 = vpop.f32.mrf.mxu0
  %v1495 = vadd.f32 %v70, %v1494
  %v1496 = vpop.f32.mrf.mxu0
  %1497 = vmatprep.mubr.bf16.mxu0 0
  %1498 = vmatmul.mubr.bf16.gmra.mxu0 %v1444
  %v1499 = vpop.f32.mrf.mxu0
  %v1500 = vadd.f32 %v70, %v1499
  %v1501 = vpop.f32.mrf.mxu0
  %v1502 = vpop.f32.mrf.mxu0
  %v1503 = vadd.f32 %v70, %v1502
  %v1504 = vpop.f32.mrf.mxu0
  %1505 = vmatprep.mubr.bf16.mxu0 0
  %1506 = vmatmul.mubr.bf16.gmra.mxu0 %v1447
  %v1507 = vpop.f32.mrf.mxu0
  %v1508 = vadd.f32 %v70, %v1507
  %v1509 = vpop.f32.mrf.mxu0
  %v1510 = vpop.f32.mrf.mxu0
  %v1511 = vpop.f32.mrf.mxu0
  %1512 = vdwg.mxu0
  %v1513 = vmax.f32 %v1484, 0.0
  %v1514 = vmax.f32 %v1487, 0.0
  %v1515 = vmax.f32 %v1492, 0.0
  %v1516 = vmax.f32 %v1495, 0.0
  %v1517 = vmax.f32 %v1500, 0.0
  %v1518 = vmax.f32 %v1503, 0.0
  %v1519 = vmax.f32 %v1508, 0.0
  %v1520 = vpack.c.bf16 %v1514, %v1513
  %v1521 = vpack.c.bf16 %v1516, %v1515
  %v1522 = vpack.c.bf16 %v1518, %v1517
  %v1523 = vpack.c.bf16 %v1519, %v1519
  %v1525 = vand.u32 %v1523, %v203
  %1527 = vmatprep.subr.bf16.mxu0 0
  %1528 = vmatpush1.bf16.msra.mxu0 0
  %1529 = vmatprep.subr.bf16.mxu0 0
  %1530 = vmatpush1.bf16.msra.mxu0 0
  %1531 = vmatprep.subr.bf16.mxu0 0
  %1532 = vmatpush1.bf16.msra.mxu0 0
  %1533 = vmatprep.subr.bf16.mxu0 0
  %1534 = vmatpush1.bf16.msra.mxu0 0
  %1535 = vmatprep.subr.bf16.mxu0 0
  %1536 = vmatpush1.bf16.msra.mxu0 %v1525
  %1537 = vmatprep.subr.bf16.mxu0 0
  %1538 = vmatpush1.bf16.msra.mxu0 %v1522
  %1539 = vmatprep.subr.bf16.mxu0 0
  %1540 = vmatpush1.bf16.msra.mxu0 %v1521
  %1541 = vmatprep.subr.bf16.mxu0 0
  %1542 = vmatpush1.bf16.msra.mxu0 %v1520
  %1543 = vmatprep.subr.bf16.mxu0 0
  %1544 = vmatpush2.bf16.msra.mxu0 0
  %1545 = vmatprep.subr.bf16.mxu0 0
  %1546 = vmatpush2.bf16.msra.mxu0 0
  %1547 = vmatprep.subr.bf16.mxu0 0
  %1548 = vmatpush2.bf16.msra.mxu0 0
  %1549 = vmatprep.subr.bf16.mxu0 0
  %1550 = vmatpush2.bf16.msra.mxu0 0
  %1551 = vmatprep.subr.bf16.mxu0 0
  %1552 = vmatpush2.bf16.msra.mxu0 0
  %1553 = vmatprep.subr.bf16.mxu0 0
  %1554 = vmatpush2.bf16.msra.mxu0 0
  %1555 = vmatprep.subr.bf16.mxu0 0
  %1556 = vmatpush2.bf16.msra.mxu0 0
  %1557 = vmatprep.subr.bf16.mxu0 0
  %1558 = vmatpush2.bf16.msra.mxu0 0
  %1559 = vmatprep.mubr.bf16.mxu0 0
  %1560 = vmatmul.mubr.bf16.gmra.mxu0 %v199
  %v1561 = vpop.f32.mrf.mxu0
  %v1562 = vadd.f32 0.0, %v1561
  %v1563 = vpop.f32.mrf.mxu0
  %v1564 = vpop.f32.mrf.mxu0
  %v1565 = vadd.f32 0.0, %v1564
  %v1566 = vpop.f32.mrf.mxu0
  %1567 = vdwg.mxu0
  %1568 = vmatprep.subr.bf16.mxu0 0
  %1569 = vmatpush1.bf16.msra.mxu0 0
  %1570 = vmatprep.subr.bf16.mxu0 0
  %1571 = vmatpush1.bf16.msra.mxu0 0
  %1572 = vmatprep.subr.bf16.mxu0 0
  %1573 = vmatpush1.bf16.msra.mxu0 0
  %1574 = vmatprep.subr.bf16.mxu0 0
  %1575 = vmatpush1.bf16.msra.mxu0 0
  %1576 = vmatprep.subr.bf16.mxu0 0
  %1577 = vmatpush1.bf16.msra.mxu0 %v1525
  %1578 = vmatprep.subr.bf16.mxu0 0
  %1579 = vmatpush1.bf16.msra.mxu0 %v1522
  %1580 = vmatprep.subr.bf16.mxu0 0
  %1581 = vmatpush1.bf16.msra.mxu0 %v1521
  %1582 = vmatprep.subr.bf16.mxu0 0
  %1583 = vmatpush1.bf16.msra.mxu0 %v1520
  %1584 = vmatprep.subr.bf16.mxu0 0
  %1585 = vmatpush2.bf16.msra.mxu0 0
  %1586 = vmatprep.subr.bf16.mxu0 0
  %1587 = vmatpush2.bf16.msra.mxu0 0
  %1588 = vmatprep.subr.bf16.mxu0 0
  %1589 = vmatpush2.bf16.msra.mxu0 0
  %1590 = vmatprep.subr.bf16.mxu0 0
  %1591 = vmatpush2.bf16.msra.mxu0 0
  %1592 = vmatprep.subr.bf16.mxu0 0
  %1593 = vmatpush2.bf16.msra.mxu0 0
  %1594 = vmatprep.subr.bf16.mxu0 0
  %1595 = vmatpush2.bf16.msra.mxu0 0
  %1596 = vmatprep.subr.bf16.mxu0 0
  %1597 = vmatpush2.bf16.msra.mxu0 0
  %1598 = vmatprep.subr.bf16.mxu0 0
  %1599 = vmatpush2.bf16.msra.mxu0 0
  %1600 = vmatprep.mubr.bf16.mxu0 0
  %1601 = vmatmul.mubr.bf16.gmra.mxu0 %v257
  %v1602 = vpop.f32.mrf.mxu0
  %v1603 = vadd.f32 0.0, %v1602
  %v1604 = vpop.f32.mrf.mxu0
  %v1605 = vpop.f32.mrf.mxu0
  %v1606 = vadd.f32 0.0, %v1605
  %v1607 = vpop.f32.mrf.mxu0
  %1608 = vdwg.mxu0
  %1609 = vmatprep.subr.bf16.mxu0 0
  %1610 = vmatpush1.bf16.msra.mxu0 0
  %1611 = vmatprep.subr.bf16.mxu0 0
  %1612 = vmatpush1.bf16.msra.mxu0 0
  %1613 = vmatprep.subr.bf16.mxu0 0
  %1614 = vmatpush1.bf16.msra.mxu0 0
  %1615 = vmatprep.subr.bf16.mxu0 0
  %1616 = vmatpush1.bf16.msra.mxu0 0
  %1617 = vmatprep.subr.bf16.mxu0 0
  %1618 = vmatpush1.bf16.msra.mxu0 %v1525
  %1619 = vmatprep.subr.bf16.mxu0 0
  %1620 = vmatpush1.bf16.msra.mxu0 %v1522
  %1621 = vmatprep.subr.bf16.mxu0 0
  %1622 = vmatpush1.bf16.msra.mxu0 %v1521
  %1623 = vmatprep.subr.bf16.mxu0 0
  %1624 = vmatpush1.bf16.msra.mxu0 %v1520
  %1625 = vmatprep.subr.bf16.mxu0 0
  %1626 = vmatpush2.bf16.msra.mxu0 0
  %1627 = vmatprep.subr.bf16.mxu0 0
  %1628 = vmatpush2.bf16.msra.mxu0 0
  %1629 = vmatprep.subr.bf16.mxu0 0
  %1630 = vmatpush2.bf16.msra.mxu0 0
  %1631 = vmatprep.subr.bf16.mxu0 0
  %1632 = vmatpush2.bf16.msra.mxu0 0
  %1633 = vmatprep.subr.bf16.mxu0 0
  %1634 = vmatpush2.bf16.msra.mxu0 0
  %1635 = vmatprep.subr.bf16.mxu0 0
  %1636 = vmatpush2.bf16.msra.mxu0 0
  %1637 = vmatprep.subr.bf16.mxu0 0
  %1638 = vmatpush2.bf16.msra.mxu0 0
  %1639 = vmatprep.subr.bf16.mxu0 0
  %1640 = vmatpush2.bf16.msra.mxu0 0
  %1641 = vmatprep.mubr.bf16.mxu0 0
  %1642 = vmatmul.mubr.bf16.gmra.mxu0 %v309
  %v1643 = vpop.f32.mrf.mxu0
  %v1644 = vadd.f32 0.0, %v1643
  %v1645 = vpop.f32.mrf.mxu0
  %v1646 = vpop.f32.mrf.mxu0
  %v1647 = vadd.f32 0.0, %v1646
  %v1648 = vpop.f32.mrf.mxu0
  %1649 = vdwg.mxu0
  %1650 = vmatprep.subr.bf16.mxu0 0
  %1651 = vmatpush1.bf16.msra.mxu0 0
  %1652 = vmatprep.subr.bf16.mxu0 0
  %1653 = vmatpush1.bf16.msra.mxu0 0
  %1654 = vmatprep.subr.bf16.mxu0 0
  %1655 = vmatpush1.bf16.msra.mxu0 0
  %1656 = vmatprep.subr.bf16.mxu0 0
  %1657 = vmatpush1.bf16.msra.mxu0 0
  %1658 = vmatprep.subr.bf16.mxu0 0
  %1659 = vmatpush1.bf16.msra.mxu0 %v1525
  %1660 = vmatprep.subr.bf16.mxu0 0
  %1661 = vmatpush1.bf16.msra.mxu0 %v1522
  %1662 = vmatprep.subr.bf16.mxu0 0
  %1663 = vmatpush1.bf16.msra.mxu0 %v1521
  %1664 = vmatprep.subr.bf16.mxu0 0
  %1665 = vmatpush1.bf16.msra.mxu0 %v1520
  %1666 = vmatprep.subr.bf16.mxu0 0
  %1667 = vmatpush2.bf16.msra.mxu0 0
  %1668 = vmatprep.subr.bf16.mxu0 0
  %1669 = vmatpush2.bf16.msra.mxu0 0
  %1670 = vmatprep.subr.bf16.mxu0 0
  %1671 = vmatpush2.bf16.msra.mxu0 0
  %1672 = vmatprep.subr.bf16.mxu0 0
  %1673 = vmatpush2.bf16.msra.mxu0 0
  %1674 = vmatprep.subr.bf16.mxu0 0
  %1675 = vmatpush2.bf16.msra.mxu0 0
  %1676 = vmatprep.subr.bf16.mxu0 0
  %1677 = vmatpush2.bf16.msra.mxu0 0
  %1678 = vmatprep.subr.bf16.mxu0 0
  %1679 = vmatpush2.bf16.msra.mxu0 0
  %1680 = vmatprep.subr.bf16.mxu0 0
  %1681 = vmatpush2.bf16.msra.mxu0 0
  %1682 = vmatprep.mubr.bf16.mxu0 0
  %1683 = vmatmul.mubr.bf16.gmra.mxu0 %v361
  %v1684 = vpop.f32.mrf.mxu0
  %v1685 = vadd.f32 0.0, %v1684
  %v1686 = vpop.f32.mrf.mxu0
  %v1687 = vpop.f32.mrf.mxu0
  %v1688 = vadd.f32 0.0, %v1687
  %v1689 = vpop.f32.mrf.mxu0
  %1690 = vdwg.mxu0
  %1691 = vmatprep.subr.bf16.mxu0 0
  %1692 = vmatpush1.bf16.msra.mxu0 0
  %1693 = vmatprep.subr.bf16.mxu0 0
  %1694 = vmatpush1.bf16.msra.mxu0 0
  %1695 = vmatprep.subr.bf16.mxu0 0
  %1696 = vmatpush1.bf16.msra.mxu0 0
  %1697 = vmatprep.subr.bf16.mxu0 0
  %1698 = vmatpush1.bf16.msra.mxu0 0
  %1699 = vmatprep.subr.bf16.mxu0 0
  %1700 = vmatpush1.bf16.msra.mxu0 %v1525
  %1701 = vmatprep.subr.bf16.mxu0 0
  %1702 = vmatpush1.bf16.msra.mxu0 %v1522
  %1703 = vmatprep.subr.bf16.mxu0 0
  %1704 = vmatpush1.bf16.msra.mxu0 %v1521
  %1705 = vmatprep.subr.bf16.mxu0 0
  %1706 = vmatpush1.bf16.msra.mxu0 %v1520
  %1707 = vmatprep.subr.bf16.mxu0 0
  %1708 = vmatpush2.bf16.msra.mxu0 0
  %1709 = vmatprep.subr.bf16.mxu0 0
  %1710 = vmatpush2.bf16.msra.mxu0 0
  %1711 = vmatprep.subr.bf16.mxu0 0
  %1712 = vmatpush2.bf16.msra.mxu0 0
  %1713 = vmatprep.subr.bf16.mxu0 0
  %1714 = vmatpush2.bf16.msra.mxu0 0
  %1715 = vmatprep.subr.bf16.mxu0 0
  %1716 = vmatpush2.bf16.msra.mxu0 0
  %1717 = vmatprep.subr.bf16.mxu0 0
  %1718 = vmatpush2.bf16.msra.mxu0 0
  %1719 = vmatprep.subr.bf16.mxu0 0
  %1720 = vmatpush2.bf16.msra.mxu0 0
  %1721 = vmatprep.subr.bf16.mxu0 0
  %1722 = vmatpush2.bf16.msra.mxu0 0
  %1723 = vmatprep.mubr.bf16.mxu0 0
  %1724 = vmatmul.mubr.bf16.gmra.mxu0 %v413
  %v1725 = vpop.f32.mrf.mxu0
  %v1726 = vadd.f32 0.0, %v1725
  %v1727 = vpop.f32.mrf.mxu0
  %v1728 = vpop.f32.mrf.mxu0
  %v1729 = vadd.f32 0.0, %v1728
  %v1730 = vpop.f32.mrf.mxu0
  %1731 = vdwg.mxu0
  %1732 = vmatprep.subr.bf16.mxu0 0
  %1733 = vmatpush1.bf16.msra.mxu0 0
  %1734 = vmatprep.subr.bf16.mxu0 0
  %1735 = vmatpush1.bf16.msra.mxu0 0
  %1736 = vmatprep.subr.bf16.mxu0 0
  %1737 = vmatpush1.bf16.msra.mxu0 0
  %1738 = vmatprep.subr.bf16.mxu0 0
  %1739 = vmatpush1.bf16.msra.mxu0 0
  %1740 = vmatprep.subr.bf16.mxu0 0
  %1741 = vmatpush1.bf16.msra.mxu0 %v1525
  %1742 = vmatprep.subr.bf16.mxu0 0
  %1743 = vmatpush1.bf16.msra.mxu0 %v1522
  %1744 = vmatprep.subr.bf16.mxu0 0
  %1745 = vmatpush1.bf16.msra.mxu0 %v1521
  %1746 = vmatprep.subr.bf16.mxu0 0
  %1747 = vmatpush1.bf16.msra.mxu0 %v1520
  %1748 = vmatprep.subr.bf16.mxu0 0
  %1749 = vmatpush2.bf16.msra.mxu0 0
  %1750 = vmatprep.subr.bf16.mxu0 0
  %1751 = vmatpush2.bf16.msra.mxu0 0
  %1752 = vmatprep.subr.bf16.mxu0 0
  %1753 = vmatpush2.bf16.msra.mxu0 0
  %1754 = vmatprep.subr.bf16.mxu0 0
  %1755 = vmatpush2.bf16.msra.mxu0 0
  %1756 = vmatprep.subr.bf16.mxu0 0
  %1757 = vmatpush2.bf16.msra.mxu0 0
  %1758 = vmatprep.subr.bf16.mxu0 0
  %1759 = vmatpush2.bf16.msra.mxu0 0
  %1760 = vmatprep.subr.bf16.mxu0 0
  %1761 = vmatpush2.bf16.msra.mxu0 0
  %1762 = vmatprep.subr.bf16.mxu0 0
  %1763 = vmatpush2.bf16.msra.mxu0 0
  %1764 = vmatprep.mubr.bf16.mxu0 0
  %1765 = vmatmul.mubr.bf16.gmra.mxu0 %v465
  %v1766 = vpop.f32.mrf.mxu0
  %v1767 = vadd.f32 0.0, %v1766
  %v1768 = vpop.f32.mrf.mxu0
  %v1769 = vpop.f32.mrf.mxu0
  %v1770 = vadd.f32 0.0, %v1769
  %v1771 = vpop.f32.mrf.mxu0
  %1772 = vdwg.mxu0
  %1773 = vmatprep.subr.bf16.mxu0 0
  %1774 = vmatpush1.bf16.msra.mxu0 0
  %1775 = vmatprep.subr.bf16.mxu0 0
  %1776 = vmatpush1.bf16.msra.mxu0 0
  %1777 = vmatprep.subr.bf16.mxu0 0
  %1778 = vmatpush1.bf16.msra.mxu0 0
  %1779 = vmatprep.subr.bf16.mxu0 0
  %1780 = vmatpush1.bf16.msra.mxu0 0
  %1781 = vmatprep.subr.bf16.mxu0 0
  %1782 = vmatpush1.bf16.msra.mxu0 %v1525
  %1783 = vmatprep.subr.bf16.mxu0 0
  %1784 = vmatpush1.bf16.msra.mxu0 %v1522
  %1785 = vmatprep.subr.bf16.mxu0 0
  %1786 = vmatpush1.bf16.msra.mxu0 %v1521
  %1787 = vmatprep.subr.bf16.mxu0 0
  %1788 = vmatpush1.bf16.msra.mxu0 %v1520
  %1789 = vmatprep.subr.bf16.mxu0 0
  %1790 = vmatpush2.bf16.msra.mxu0 0
  %1791 = vmatprep.subr.bf16.mxu0 0
  %1792 = vmatpush2.bf16.msra.mxu0 0
  %1793 = vmatprep.subr.bf16.mxu0 0
  %1794 = vmatpush2.bf16.msra.mxu0 0
  %1795 = vmatprep.subr.bf16.mxu0 0
  %1796 = vmatpush2.bf16.msra.mxu0 0
  %1797 = vmatprep.subr.bf16.mxu0 0
  %1798 = vmatpush2.bf16.msra.mxu0 0
  %1799 = vmatprep.subr.bf16.mxu0 0
  %1800 = vmatpush2.bf16.msra.mxu0 0
  %1801 = vmatprep.subr.bf16.mxu0 0
  %1802 = vmatpush2.bf16.msra.mxu0 0
  %1803 = vmatprep.subr.bf16.mxu0 0
  %1804 = vmatpush2.bf16.msra.mxu0 0
  %1805 = vmatprep.mubr.bf16.mxu0 0
  %1806 = vmatmul.mubr.bf16.gmra.mxu0 %v517
  %v1807 = vpop.f32.mrf.mxu0
  %v1808 = vadd.f32 0.0, %v1807
  %v1809 = vpop.f32.mrf.mxu0
  %v1810 = vpop.f32.mrf.mxu0
  %v1811 = vadd.f32 0.0, %v1810
  %v1812 = vpop.f32.mrf.mxu0
  %1813 = vdwg.mxu0
  %1814 = vmatprep.subr.bf16.mxu0 0
  %1815 = vmatpush1.bf16.msra.mxu0 0
  %1816 = vmatprep.subr.bf16.mxu0 0
  %1817 = vmatpush1.bf16.msra.mxu0 0
  %1818 = vmatprep.subr.bf16.mxu0 0
  %1819 = vmatpush1.bf16.msra.mxu0 0
  %1820 = vmatprep.subr.bf16.mxu0 0
  %1821 = vmatpush1.bf16.msra.mxu0 0
  %1822 = vmatprep.subr.bf16.mxu0 0
  %1823 = vmatpush1.bf16.msra.mxu0 %v1525
  %1824 = vmatprep.subr.bf16.mxu0 0
  %1825 = vmatpush1.bf16.msra.mxu0 %v1522
  %1826 = vmatprep.subr.bf16.mxu0 0
  %1827 = vmatpush1.bf16.msra.mxu0 %v1521
  %1828 = vmatprep.subr.bf16.mxu0 0
  %1829 = vmatpush1.bf16.msra.mxu0 %v1520
  %1830 = vmatprep.subr.bf16.mxu0 0
  %1831 = vmatpush2.bf16.msra.mxu0 0
  %1832 = vmatprep.subr.bf16.mxu0 0
  %1833 = vmatpush2.bf16.msra.mxu0 0
  %1834 = vmatprep.subr.bf16.mxu0 0
  %1835 = vmatpush2.bf16.msra.mxu0 0
  %1836 = vmatprep.subr.bf16.mxu0 0
  %1837 = vmatpush2.bf16.msra.mxu0 0
  %1838 = vmatprep.subr.bf16.mxu0 0
  %1839 = vmatpush2.bf16.msra.mxu0 0
  %1840 = vmatprep.subr.bf16.mxu0 0
  %1841 = vmatpush2.bf16.msra.mxu0 0
  %1842 = vmatprep.subr.bf16.mxu0 0
  %1843 = vmatpush2.bf16.msra.mxu0 0
  %1844 = vmatprep.subr.bf16.mxu0 0
  %1845 = vmatpush2.bf16.msra.mxu0 0
  %1846 = vmatprep.mubr.bf16.mxu0 0
  %1847 = vmatmul.mubr.bf16.gmra.mxu0 %v569
  %v1848 = vpop.f32.mrf.mxu0
  %v1849 = vadd.f32 0.0, %v1848
  %v1850 = vpop.f32.mrf.mxu0
  %v1851 = vpop.f32.mrf.mxu0
  %v1852 = vadd.f32 0.0, %v1851
  %v1853 = vpop.f32.mrf.mxu0
  %1854 = vdwg.mxu0
  %1855 = vmatprep.subr.bf16.mxu0 0
  %1856 = vmatpush1.bf16.msra.mxu0 0
  %1857 = vmatprep.subr.bf16.mxu0 0
  %1858 = vmatpush1.bf16.msra.mxu0 0
  %1859 = vmatprep.subr.bf16.mxu0 0
  %1860 = vmatpush1.bf16.msra.mxu0 0
  %1861 = vmatprep.subr.bf16.mxu0 0
  %1862 = vmatpush1.bf16.msra.mxu0 0
  %1863 = vmatprep.subr.bf16.mxu0 0
  %1864 = vmatpush1.bf16.msra.mxu0 %v1525
  %1865 = vmatprep.subr.bf16.mxu0 0
  %1866 = vmatpush1.bf16.msra.mxu0 %v1522
  %1867 = vmatprep.subr.bf16.mxu0 0
  %1868 = vmatpush1.bf16.msra.mxu0 %v1521
  %1869 = vmatprep.subr.bf16.mxu0 0
  %1870 = vmatpush1.bf16.msra.mxu0 %v1520
  %1871 = vmatprep.subr.bf16.mxu0 0
  %1872 = vmatpush2.bf16.msra.mxu0 0
  %1873 = vmatprep.subr.bf16.mxu0 0
  %1874 = vmatpush2.bf16.msra.mxu0 0
  %1875 = vmatprep.subr.bf16.mxu0 0
  %1876 = vmatpush2.bf16.msra.mxu0 0
  %1877 = vmatprep.subr.bf16.mxu0 0
  %1878 = vmatpush2.bf16.msra.mxu0 0
  %1879 = vmatprep.subr.bf16.mxu0 0
  %1880 = vmatpush2.bf16.msra.mxu0 0
  %1881 = vmatprep.subr.bf16.mxu0 0
  %1882 = vmatpush2.bf16.msra.mxu0 0
  %1883 = vmatprep.subr.bf16.mxu0 0
  %1884 = vmatpush2.bf16.msra.mxu0 0
  %1885 = vmatprep.subr.bf16.mxu0 0
  %1886 = vmatpush2.bf16.msra.mxu0 0
  %1887 = vmatprep.mubr.bf16.mxu0 0
  %1888 = vmatmul.mubr.bf16.gmra.mxu0 %v621
  %v1889 = vpop.f32.mrf.mxu0
  %v1890 = vadd.f32 0.0, %v1889
  %v1891 = vpop.f32.mrf.mxu0
  %v1892 = vpop.f32.mrf.mxu0
  %v1893 = vadd.f32 0.0, %v1892
  %v1894 = vpop.f32.mrf.mxu0
  %1895 = vdwg.mxu0
  %1898 = vrot.lane.b32.xlu0 %v1603, 32
  %v1899 = vpop.permute.xlu0 %1898
  %1900 = vrot.lane.b32.xlu0 %v1606, 32
  %v1901 = vpop.permute.xlu0 %1900
  %1906 = vrot.lane.b32.xlu0 %v1644, 64
  %v1907 = vpop.permute.xlu0 %1906
  %1908 = vrot.lane.b32.xlu0 %v1647, 64
  %v1909 = vpop.permute.xlu0 %1908
  %1914 = vrot.lane.b32.xlu0 %v1685, 96
  %v1915 = vpop.permute.xlu0 %1914
  %1916 = vrot.lane.b32.xlu0 %v1688, 96
  %v1917 = vpop.permute.xlu0 %1916
  %1922 = vrot.lane.b32.xlu0 %v1767, 32
  %v1923 = vpop.permute.xlu0 %1922
  %1924 = vrot.lane.b32.xlu0 %v1770, 32
  %v1925 = vpop.permute.xlu0 %1924
  %1930 = vrot.lane.b32.xlu0 %v1808, 64
  %v1931 = vpop.permute.xlu0 %1930
  %1932 = vrot.lane.b32.xlu0 %v1811, 64
  %v1933 = vpop.permute.xlu0 %1932
  %1938 = vrot.lane.b32.xlu0 %v1849, 96
  %v1939 = vpop.permute.xlu0 %1938
  %1940 = vrot.lane.b32.xlu0 %v1852, 96
  %v1941 = vpop.permute.xlu0 %1940
  %v1944 = vsel %vm102, %v1562, %v1899
  %v1945 = vsel %vm102, %v1565, %v1901
  %v1946 = vsel %vm714, %v1944, %v1907
  %v1947 = vsel %vm714, %v1945, %v1909
  %v1948 = vsel %vm717, %v1946, %v1915
  %v1949 = vsel %vm717, %v1947, %v1917
  %v1950 = vsel %vm102, %v1726, %v1923
  %v1951 = vsel %vm102, %v1729, %v1925
  %v1952 = vsel %vm714, %v1950, %v1931
  %v1953 = vsel %vm714, %v1951, %v1933
  %v1954 = vsel %vm717, %v1952, %v1939
  %v1955 = vsel %vm717, %v1953, %v1941
  %v1956 = vpack.c.bf16 %v1949, %v1948
  %v1957 = vpack.c.bf16 %v1955, %v1954
  %v1958 = vpack.c.bf16 %v1893, %v1890
  %v1960 = vsel %vm102, %v1958, 0
  %1962 = vmatprep.subr.bf16.mxu0 0
  %1963 = vmatpush1.bf16.msra.mxu0 %v851
  %1964 = vmatprep.subr.bf16.mxu0 0
  %1965 = vmatpush1.bf16.msra.mxu0 %v850
  %1966 = vmatprep.subr.bf16.mxu0 0
  %1967 = vmatpush1.bf16.msra.mxu0 %v849
  %1968 = vmatprep.subr.bf16.mxu0 0
  %1969 = vmatpush1.bf16.msra.mxu0 %v848
  %1970 = vmatprep.subr.bf16.mxu0 0
  %1971 = vmatpush1.bf16.msra.mxu0 %v847
  %1972 = vmatprep.subr.bf16.mxu0 0
  %1973 = vmatpush1.bf16.msra.mxu0 %v846
  %1974 = vmatprep.subr.bf16.mxu0 0
  %1975 = vmatpush1.bf16.msra.mxu0 %v845
  %1976 = vmatprep.subr.bf16.mxu0 0
  %1977 = vmatpush1.bf16.msra.mxu0 %v844
  %1978 = vmatprep.subr.bf16.mxu0 0
  %1979 = vmatpush2.bf16.msra.mxu0 %v859
  %1980 = vmatprep.subr.bf16.mxu0 0
  %1981 = vmatpush2.bf16.msra.mxu0 %v858
  %1982 = vmatprep.subr.bf16.mxu0 0
  %1983 = vmatpush2.bf16.msra.mxu0 %v857
  %1984 = vmatprep.subr.bf16.mxu0 0
  %1985 = vmatpush2.bf16.msra.mxu0 %v856
  %1986 = vmatprep.subr.bf16.mxu0 0
  %1987 = vmatpush2.bf16.msra.mxu0 %v855
  %1988 = vmatprep.subr.bf16.mxu0 0
  %1989 = vmatpush2.bf16.msra.mxu0 %v854
  %1990 = vmatprep.subr.bf16.mxu0 0
  %1991 = vmatpush2.bf16.msra.mxu0 %v853
  %1992 = vmatprep.subr.bf16.mxu0 0
  %1993 = vmatpush2.bf16.msra.mxu0 %v852
  %1994 = vmatprep.mubr.bf16.mxu0 %v1957
  %1995 = vmatmul.mubr.bf16.gmra.mxu0 %v1956
  %v1996 = vpop.f32.mrf.mxu0
  %v1997 = vadd.f32 %v770, %v1996
  %v1998 = vpop.f32.mrf.mxu0
  %v1999 = vpop.f32.mrf.mxu0
  %v2000 = vadd.f32 %v770, %v1999
  %v2001 = vpop.f32.mrf.mxu0
  %2002 = vdwg.mxu0
  %2003 = vmatprep.subr.bf16.mxu0 0
  %2004 = vmatpush1.bf16.msra.mxu0 0
  %2005 = vmatprep.subr.bf16.mxu0 0
  %2006 = vmatpush1.bf16.msra.mxu0 0
  %2007 = vmatprep.subr.bf16.mxu0 0
  %2008 = vmatpush1.bf16.msra.mxu0 0
  %2009 = vmatprep.subr.bf16.mxu0 0
  %2010 = vmatpush1.bf16.msra.mxu0 0
  %2011 = vmatprep.subr.bf16.mxu0 0
  %2012 = vmatpush1.bf16.msra.mxu0 0
  %2013 = vmatprep.subr.bf16.mxu0 0
  %2014 = vmatpush1.bf16.msra.mxu0 0
  %2015 = vmatprep.subr.bf16.mxu0 0
  %2016 = vmatpush1.bf16.msra.mxu0 %v861
  %2017 = vmatprep.subr.bf16.mxu0 0
  %2018 = vmatpush1.bf16.msra.mxu0 %v860
  %2019 = vmatprep.subr.bf16.mxu0 0
  %2020 = vmatpush2.bf16.msra.mxu0 0
  %2021 = vmatprep.subr.bf16.mxu0 0
  %2022 = vmatpush2.bf16.msra.mxu0 0
  %2023 = vmatprep.subr.bf16.mxu0 0
  %2024 = vmatpush2.bf16.msra.mxu0 0
  %2025 = vmatprep.subr.bf16.mxu0 0
  %2026 = vmatpush2.bf16.msra.mxu0 0
  %2027 = vmatprep.subr.bf16.mxu0 0
  %2028 = vmatpush2.bf16.msra.mxu0 0
  %2029 = vmatprep.subr.bf16.mxu0 0
  %2030 = vmatpush2.bf16.msra.mxu0 0
  %2031 = vmatprep.subr.bf16.mxu0 0
  %2032 = vmatpush2.bf16.msra.mxu0 0
  %2033 = vmatprep.subr.bf16.mxu0 0
  %2034 = vmatpush2.bf16.msra.mxu0 0
  %2035 = vmatprep.mubr.bf16.mxu0 0
  %2036 = vmatmul.mubr.bf16.gmra.mxu0 %v1960
  %v2037 = vpop.f32.mrf.mxu0
  %v2038 = vadd.f32 %v1997, %v2037
  %v2039 = vpop.f32.mrf.mxu0
  %v2040 = vpop.f32.mrf.mxu0
  %v2041 = vadd.f32 %v2000, %v2040
  %v2042 = vpop.f32.mrf.mxu0
  %2043 = vdwg.mxu0
  %v2044 = vmax.f32 %v2038, 0.0
  %v2045 = vmax.f32 %v2041, 0.0
  %v2047 = vrot.slane %v2044, 1
  %2048 = vrot.lane.b32.xlu0 %v2047, 64
  %v2049 = vpop.permute.xlu0 %2048
  %v2051 = vrot.slane %v2044, 2
  %v2053 = vrot.slane %v2044, 3
  %2054 = vrot.lane.b32.xlu0 %v2053, 64
  %v2055 = vpop.permute.xlu0 %2054
  %v2057 = vrot.slane %v2044, 4
  %v2059 = vrot.slane %v2044, 5
  %2060 = vrot.lane.b32.xlu0 %v2059, 64
  %v2061 = vpop.permute.xlu0 %2060
  %v2063 = vrot.slane %v2044, 6
  %v2065 = vrot.slane %v2044, 7
  %2066 = vrot.lane.b32.xlu0 %v2065, 64
  %v2067 = vpop.permute.xlu0 %2066
  %v2069 = vsel %vm714, %v2044, %v2049
  %v2070 = vsel %vm714, %v2051, %v2055
  %v2071 = vsel %vm714, %v2057, %v2061
  %v2072 = vsel %vm714, %v2063, %v2067
  %v2073 = vpack.c.bf16 %v2069, %v2069
  %v2074 = vpack.c.bf16 %v2070, %v2070
  %v2075 = vpack.c.bf16 %v2071, %v2071
  %v2076 = vpack.c.bf16 %v2072, %v2072
  %v2077 = vpack.c.bf16 %v2045, %v2045
  %v2079 = vsel %vm714, %v2077, 0
  %2081 = vmatprep.subr.bf16.mxu0 0
  %2082 = vmatpush1.bf16.msra.mxu0 %v1223
  %2083 = vmatprep.subr.bf16.mxu0 0
  %2084 = vmatpush1.bf16.msra.mxu0 %v1222
  %2085 = vmatprep.subr.bf16.mxu0 0
  %2086 = vmatpush1.bf16.msra.mxu0 %v1221
  %2087 = vmatprep.subr.bf16.mxu0 0
  %2088 = vmatpush1.bf16.msra.mxu0 %v1220
  %2089 = vmatprep.subr.bf16.mxu0 0
  %2090 = vmatpush1.bf16.msra.mxu0 %v1219
  %2091 = vmatprep.subr.bf16.mxu0 0
  %2092 = vmatpush1.bf16.msra.mxu0 %v1218
  %2093 = vmatprep.subr.bf16.mxu0 0
  %2094 = vmatpush1.bf16.msra.mxu0 %v1217
  %2095 = vmatprep.subr.bf16.mxu0 0
  %2096 = vmatpush1.bf16.msra.mxu0 %v1216
  %2097 = vmatprep.subr.bf16.mxu0 0
  %2098 = vmatpush2.bf16.msra.mxu0 %v1231
  %2099 = vmatprep.subr.bf16.mxu0 0
  %2100 = vmatpush2.bf16.msra.mxu0 %v1230
  %2101 = vmatprep.subr.bf16.mxu0 0
  %2102 = vmatpush2.bf16.msra.mxu0 %v1229
  %2103 = vmatprep.subr.bf16.mxu0 0
  %2104 = vmatpush2.bf16.msra.mxu0 %v1228
  %2105 = vmatprep.subr.bf16.mxu0 0
  %2106 = vmatpush2.bf16.msra.mxu0 %v1227
  %2107 = vmatprep.subr.bf16.mxu0 0
  %2108 = vmatpush2.bf16.msra.mxu0 %v1226
  %2109 = vmatprep.subr.bf16.mxu0 0
  %2110 = vmatpush2.bf16.msra.mxu0 %v1225
  %2111 = vmatprep.subr.bf16.mxu0 0
  %2112 = vmatpush2.bf16.msra.mxu0 %v1224
  %2113 = vmatprep.mubr.bf16.mxu0 %v2074
  %2114 = vmatmul.mubr.bf16.gmra.mxu0 %v2073
  %v2115 = vpop.f32.mrf.mxu0
  %v2116 = vadd.f32 %v1071, %v2115
  %v2117 = vpop.f32.mrf.mxu0
  %v2118 = vpop.f32.mrf.mxu0
  %v2119 = vpop.f32.mrf.mxu0
  %2120 = vdwg.mxu0
  %2121 = vmatprep.subr.bf16.mxu0 0
  %2122 = vmatpush1.bf16.msra.mxu0 %v1239
  %2123 = vmatprep.subr.bf16.mxu0 0
  %2124 = vmatpush1.bf16.msra.mxu0 %v1238
  %2125 = vmatprep.subr.bf16.mxu0 0
  %2126 = vmatpush1.bf16.msra.mxu0 %v1237
  %2127 = vmatprep.subr.bf16.mxu0 0
  %2128 = vmatpush1.bf16.msra.mxu0 %v1236
  %2129 = vmatprep.subr.bf16.mxu0 0
  %2130 = vmatpush1.bf16.msra.mxu0 %v1235
  %2131 = vmatprep.subr.bf16.mxu0 0
  %2132 = vmatpush1.bf16.msra.mxu0 %v1234
  %2133 = vmatprep.subr.bf16.mxu0 0
  %2134 = vmatpush1.bf16.msra.mxu0 %v1233
  %2135 = vmatprep.subr.bf16.mxu0 0
  %2136 = vmatpush1.bf16.msra.mxu0 %v1232
  %2137 = vmatprep.subr.bf16.mxu0 0
  %2138 = vmatpush2.bf16.msra.mxu0 %v1247
  %2139 = vmatprep.subr.bf16.mxu0 0
  %2140 = vmatpush2.bf16.msra.mxu0 %v1246
  %2141 = vmatprep.subr.bf16.mxu0 0
  %2142 = vmatpush2.bf16.msra.mxu0 %v1245
  %2143 = vmatprep.subr.bf16.mxu0 0
  %2144 = vmatpush2.bf16.msra.mxu0 %v1244
  %2145 = vmatprep.subr.bf16.mxu0 0
  %2146 = vmatpush2.bf16.msra.mxu0 %v1243
  %2147 = vmatprep.subr.bf16.mxu0 0
  %2148 = vmatpush2.bf16.msra.mxu0 %v1242
  %2149 = vmatprep.subr.bf16.mxu0 0
  %2150 = vmatpush2.bf16.msra.mxu0 %v1241
  %2151 = vmatprep.subr.bf16.mxu0 0
  %2152 = vmatpush2.bf16.msra.mxu0 %v1240
  %2153 = vmatprep.mubr.bf16.mxu0 %v2076
  %2154 = vmatmul.mubr.bf16.gmra.mxu0 %v2075
  %v2155 = vpop.f32.mrf.mxu0
  %v2156 = vadd.f32 %v2116, %v2155
  %v2157 = vpop.f32.mrf.mxu0
  %v2158 = vpop.f32.mrf.mxu0
  %v2159 = vpop.f32.mrf.mxu0
  %2160 = vdwg.mxu0
  %2161 = vmatprep.subr.bf16.mxu0 0
  %2162 = vmatpush1.bf16.msra.mxu0 0
  %2163 = vmatprep.subr.bf16.mxu0 0
  %2164 = vmatpush1.bf16.msra.mxu0 0
  %2165 = vmatprep.subr.bf16.mxu0 0
  %2166 = vmatpush1.bf16.msra.mxu0 0
  %2167 = vmatprep.subr.bf16.mxu0 0
  %2168 = vmatpush1.bf16.msra.mxu0 0
  %2169 = vmatprep.subr.bf16.mxu0 0
  %2170 = vmatpush1.bf16.msra.mxu0 %v1251
  %2171 = vmatprep.subr.bf16.mxu0 0
  %2172 = vmatpush1.bf16.msra.mxu0 %v1250
  %2173 = vmatprep.subr.bf16.mxu0 0
  %2174 = vmatpush1.bf16.msra.mxu0 %v1249
  %2175 = vmatprep.subr.bf16.mxu0 0
  %2176 = vmatpush1.bf16.msra.mxu0 %v1248
  %2177 = vmatprep.subr.bf16.mxu0 0
  %2178 = vmatpush2.bf16.msra.mxu0 0
  %2179 = vmatprep.subr.bf16.mxu0 0
  %2180 = vmatpush2.bf16.msra.mxu0 0
  %2181 = vmatprep.subr.bf16.mxu0 0
  %2182 = vmatpush2.bf16.msra.mxu0 0
  %2183 = vmatprep.subr.bf16.mxu0 0
  %2184 = vmatpush2.bf16.msra.mxu0 0
  %2185 = vmatprep.subr.bf16.mxu0 0
  %2186 = vmatpush2.bf16.msra.mxu0 0
  %2187 = vmatprep.subr.bf16.mxu0 0
  %2188 = vmatpush2.bf16.msra.mxu0 0
  %2189 = vmatprep.subr.bf16.mxu0 0
  %2190 = vmatpush2.bf16.msra.mxu0 0
  %2191 = vmatprep.subr.bf16.mxu0 0
  %2192 = vmatpush2.bf16.msra.mxu0 0
  %2193 = vmatprep.mubr.bf16.mxu0 0
  %2194 = vmatmul.mubr.bf16.gmra.mxu0 %v2079
  %v2195 = vpop.f32.mrf.mxu0
  %v2196 = vadd.f32 %v2156, %v2195
  %v2197 = vpop.f32.mrf.mxu0
  %v2198 = vpop.f32.mrf.mxu0
  %v2199 = vpop.f32.mrf.mxu0
  %2200 = vdwg.mxu0
  %v2202 = vrot.slane %v2196, 7
  %v2204 = vsel %vm201, %v1406, %v2202
  %v2205 = vpack.c.bf16 %v2204, %v2204
  %v2206 = vld [vmem:[%s9] sm:$0xf]
  %v2207 = vld [vmem:[%s9 + $0x4] sm:$0xf]
  %v2208 = vld [vmem:[%s9 + $0x8] sm:$0xf]
  %v2209 = vld [vmem:[%s9 + $0xc] sm:$0xf]
  %v2210 = vld [vmem:[%s10] sm:$0x1]
  %v2212 = vlaneseq
  %v2213 = vshrl.u32 %v2212, 7
  %v2214 = vsub.s32 0, %v2213
  %v2215 = vrot.slane %v2210, %v2214
  %v2221 = vunpack.c.l.b16 %v2206
  %v2222 = vunpack.c.l.b16 %v2207
  %v2223 = vunpack.c.l.b16 %v2208
  %v2224 = vunpack.c.l.b16 %v2209
  %v2225 = vpack.c.b16 %v2222, %v2221
  %v2226 = vpack.c.b16 %v2224, %v2223
  %v2230 = vsel %vm102, %v2205, 0
  %2232 = vmatprep.subr.bf16.mxu0 0
  %2233 = vmatpush1.bf16.msra.mxu0 0
  %2234 = vmatprep.subr.bf16.mxu0 0
  %2235 = vmatpush1.bf16.msra.mxu0 0
  %2236 = vmatprep.subr.bf16.mxu0 0
  %2237 = vmatpush1.bf16.msra.mxu0 0
  %2238 = vmatprep.subr.bf16.mxu0 0
  %2239 = vmatpush1.bf16.msra.mxu0 0
  %2240 = vmatprep.subr.bf16.mxu0 0
  %2241 = vmatpush1.bf16.msra.mxu0 0
  %2242 = vmatprep.subr.bf16.mxu0 0
  %2243 = vmatpush1.bf16.msra.mxu0 0
  %2244 = vmatprep.subr.bf16.mxu0 0
  %2245 = vmatpush1.bf16.msra.mxu0 %v2226
  %2246 = vmatprep.subr.bf16.mxu0 0
  %2247 = vmatpush1.bf16.msra.mxu0 %v2225
  %2248 = vmatprep.subr.bf16.mxu0 0
  %2249 = vmatpush2.bf16.msra.mxu0 0
  %2250 = vmatprep.subr.bf16.mxu0 0
  %2251 = vmatpush2.bf16.msra.mxu0 0
  %2252 = vmatprep.subr.bf16.mxu0 0
  %2253 = vmatpush2.bf16.msra.mxu0 0
  %2254 = vmatprep.subr.bf16.mxu0 0
  %2255 = vmatpush2.bf16.msra.mxu0 0
  %2256 = vmatprep.subr.bf16.mxu0 0
  %2257 = vmatpush2.bf16.msra.mxu0 0
  %2258 = vmatprep.subr.bf16.mxu0 0
  %2259 = vmatpush2.bf16.msra.mxu0 0
  %2260 = vmatprep.subr.bf16.mxu0 0
  %2261 = vmatpush2.bf16.msra.mxu0 0
  %2262 = vmatprep.subr.bf16.mxu0 0
  %2263 = vmatpush2.bf16.msra.mxu0 0
  %2264 = vmatprep.mubr.bf16.mxu0 0
  %2265 = vmatmul.mubr.bf16.gmra.mxu0 %v2230
  %v2266 = vpop.f32.mrf.mxu0
  %v2267 = vadd.f32 %v2215, %v2266
  %v2268 = vpop.f32.mrf.mxu0
  %v2269 = vpop.f32.mrf.mxu0
  %v2270 = vpop.f32.mrf.mxu0
  %2271 = vdwg.mxu0
  %v2272 = vmax.f32 %v2267, 0.0
  %v2273 = vpack.c.bf16 %v2272, %v2272
  %v2274 = vld [vmem:[%s11] sm:$0xf]
  %v2275 = vld [vmem:[%s11 + $0x4] sm:$0xf]
  %v2276 = vld [vmem:[%s11 + $0x8] sm:$0xf]
  %v2277 = vld [vmem:[%s11 + $0xc] sm:$0xf]
  %v2278 = vld [vmem:[%s11 + $0x10] sm:$0xf]
  %v2279 = vld [vmem:[%s11 + $0x14] sm:$0xf]
  %v2280 = vld [vmem:[%s11 + $0x18] sm:$0xf]
  %v2281 = vld [vmem:[%s11 + $0x1c] sm:$0xf]
  %v2282 = vld [vmem:[%s12] sm:$0x1]
  %v2284 = vlaneseq
  %v2285 = vshrl.u32 %v2284, 7
  %v2286 = vsub.s32 0, %v2285
  %v2287 = vrot.slane %v2282, %v2286
  %v2297 = vunpack.c.l.b16 %v2274
  %v2298 = vunpack.c.l.b16 %v2275
  %v2299 = vunpack.c.l.b16 %v2276
  %v2300 = vunpack.c.l.b16 %v2277
  %v2301 = vunpack.c.l.b16 %v2278
  %v2302 = vunpack.c.l.b16 %v2279
  %v2303 = vunpack.c.l.b16 %v2280
  %v2304 = vunpack.c.l.b16 %v2281
  %v2305 = vpack.c.b16 %v2298, %v2297
  %v2306 = vpack.c.b16 %v2300, %v2299
  %v2307 = vpack.c.b16 %v2302, %v2301
  %v2308 = vpack.c.b16 %v2304, %v2303
  %v2314 = vsel %vm714, %v2273, 0
  %2316 = vmatprep.subr.bf16.mxu0 0
  %2317 = vmatpush1.bf16.msra.mxu0 0
  %2318 = vmatprep.subr.bf16.mxu0 0
  %2319 = vmatpush1.bf16.msra.mxu0 0
  %2320 = vmatprep.subr.bf16.mxu0 0
  %2321 = vmatpush1.bf16.msra.mxu0 0
  %2322 = vmatprep.subr.bf16.mxu0 0
  %2323 = vmatpush1.bf16.msra.mxu0 0
  %2324 = vmatprep.subr.bf16.mxu0 0
  %2325 = vmatpush1.bf16.msra.mxu0 %v2308
  %2326 = vmatprep.subr.bf16.mxu0 0
  %2327 = vmatpush1.bf16.msra.mxu0 %v2307
  %2328 = vmatprep.subr.bf16.mxu0 0
  %2329 = vmatpush1.bf16.msra.mxu0 %v2306
  %2330 = vmatprep.subr.bf16.mxu0 0
  %2331 = vmatpush1.bf16.msra.mxu0 %v2305
  %2332 = vmatprep.subr.bf16.mxu0 0
  %2333 = vmatpush2.bf16.msra.mxu0 0
  %2334 = vmatprep.subr.bf16.mxu0 0
  %2335 = vmatpush2.bf16.msra.mxu0 0
  %2336 = vmatprep.subr.bf16.mxu0 0
  %2337 = vmatpush2.bf16.msra.mxu0 0
  %2338 = vmatprep.subr.bf16.mxu0 0
  %2339 = vmatpush2.bf16.msra.mxu0 0
  %2340 = vmatprep.subr.bf16.mxu0 0
  %2341 = vmatpush2.bf16.msra.mxu0 0
  %2342 = vmatprep.subr.bf16.mxu0 0
  %2343 = vmatpush2.bf16.msra.mxu0 0
  %2344 = vmatprep.subr.bf16.mxu0 0
  %2345 = vmatpush2.bf16.msra.mxu0 0
  %2346 = vmatprep.subr.bf16.mxu0 0
  %2347 = vmatpush2.bf16.msra.mxu0 0
  %2348 = vmatprep.mubr.bf16.mxu0 0
  %2349 = vmatmul.mubr.bf16.gmra.mxu0 %v2314
  %v2350 = vpop.f32.mrf.mxu0
  %v2351 = vadd.f32 %v2287, %v2350
  %v2352 = vpop.f32.mrf.mxu0
  %v2353 = vpop.f32.mrf.mxu0
  %v2354 = vpop.f32.mrf.mxu0
  %2355 = vdwg.mxu0
  %v2356 = vmax.f32 %v2351, 0.0
  %v2357 = vand.u32 2147483647, %v2351
  %v2358 = vsub.f32 0.0, %v2357
  %v2359 = vmul.f32 %v2358, 1.442695
  %v2360 = vpow.pop %v2359
  %v2361 = vadd.f32 %v2360, 1.0
  %v2362 = vlog2.pop %v2361
  %v2363 = vmul.f32 %v2362, 0.6931472
  %v2364 = vadd.f32 %v2356, %v2363
  %v2365 = vadd.f32 %v2364, 0.01
  %v2366 = vld [vmem:[%s1] sm:$0x1]
  %v2367 = vld [vmem:[%s13] sm:$0x3]
  %vm2368 = vcmask 23552
  %v2370 = vsel %vm2368, %v2366, 0
  %vm2372 = vcmask 1041408
  %v2373 = vsel %vm201, 4294967295, 65535
  %v2374 = vsel %vm2372, %v2373, 0
  %v2376 = vand.u32 %v2367, %v2374
  %2378 = vmatprep.subr.bf16.mxu0 0
  %2379 = vmatpush1.bf16.msra.mxu0 0
  %2380 = vmatprep.subr.bf16.mxu0 0
  %2381 = vmatpush1.bf16.msra.mxu0 0
  %2382 = vmatprep.subr.bf16.mxu0 0
  %2383 = vmatpush1.bf16.msra.mxu0 0
  %2384 = vmatprep.subr.bf16.mxu0 0
  %2385 = vmatpush1.bf16.msra.mxu0 0
  %2386 = vmatprep.subr.bf16.mxu0 0
  %2387 = vmatpush1.bf16.msra.mxu0 0
  %2388 = vmatprep.subr.bf16.mxu0 0
  %2389 = vmatpush1.bf16.msra.mxu0 0
  %2390 = vmatprep.subr.bf16.mxu0 0
  %2391 = vmatpush1.bf16.msra.mxu0 0
  %2392 = vmatprep.subr.bf16.mxu0 0
  %2393 = vmatpush1.bf16.msra.mxu0 %v2376
  %2394 = vmatprep.subr.bf16.mxu0 0
  %2395 = vmatpush2.bf16.msra.mxu0 0
  %2396 = vmatprep.subr.bf16.mxu0 0
  %2397 = vmatpush2.bf16.msra.mxu0 0
  %2398 = vmatprep.subr.bf16.mxu0 0
  %2399 = vmatpush2.bf16.msra.mxu0 0
  %2400 = vmatprep.subr.bf16.mxu0 0
  %2401 = vmatpush2.bf16.msra.mxu0 0
  %2402 = vmatprep.subr.bf16.mxu0 0
  %2403 = vmatpush2.bf16.msra.mxu0 0
  %2404 = vmatprep.subr.bf16.mxu0 0
  %2405 = vmatpush2.bf16.msra.mxu0 0
  %2406 = vmatprep.subr.bf16.mxu0 0
  %2407 = vmatpush2.bf16.msra.mxu0 0
  %2408 = vmatprep.subr.bf16.mxu0 0
  %2409 = vmatpush2.bf16.msra.mxu0 0
  %2410 = vmatprep.mubr.bf16.mxu0 0
  %2411 = vmatmul.mubr.bf16.gmra.mxu0 %v2370
  %v2412 = vpop.f32.mrf.mxu0
  %v2413 = vadd.f32 0.0, %v2412
  %v2414 = vpop.f32.mrf.mxu0
  %v2415 = vpop.f32.mrf.mxu0
  %v2416 = vpop.f32.mrf.mxu0
  %2417 = vdwg.mxu0
  %2419 = vrot.lane.b32.xlu0 %v2413, 64
  %v2420 = vpop.permute.xlu0 %2419
  %v2422 = vadd.f32 %v2267, %v2420
  %v2423 = vmax.f32 %v2422, 0.0
  %v2424 = vpack.c.bf16 %v2365, %v2365
  %v2426 = vsel %vm2368, %v2424, 0
  %2428 = vmatprep.subr.bf16.mxu0 0
  %2429 = vmatpush1.bf16.msra.mxu0 0
  %2430 = vmatprep.subr.bf16.mxu0 0
  %2431 = vmatpush1.bf16.msra.mxu0 0
  %2432 = vmatprep.subr.bf16.mxu0 0
  %2433 = vmatpush1.bf16.msra.mxu0 0
  %2434 = vmatprep.subr.bf16.mxu0 0
  %2435 = vmatpush1.bf16.msra.mxu0 0
  %2436 = vmatprep.subr.bf16.mxu0 0
  %2437 = vmatpush1.bf16.msra.mxu0 0
  %2438 = vmatprep.subr.bf16.mxu0 0
  %2439 = vmatpush1.bf16.msra.mxu0 0
  %2440 = vmatprep.subr.bf16.mxu0 0
  %2441 = vmatpush1.bf16.msra.mxu0 0
  %2442 = vmatprep.subr.bf16.mxu0 0
  %2443 = vmatpush1.bf16.msra.mxu0 %v2376
  %2444 = vmatprep.subr.bf16.mxu0 0
  %2445 = vmatpush2.bf16.msra.mxu0 0
  %2446 = vmatprep.subr.bf16.mxu0 0
  %2447 = vmatpush2.bf16.msra.mxu0 0
  %2448 = vmatprep.subr.bf16.mxu0 0
  %2449 = vmatpush2.bf16.msra.mxu0 0
  %2450 = vmatprep.subr.bf16.mxu0 0
  %2451 = vmatpush2.bf16.msra.mxu0 0
  %2452 = vmatprep.subr.bf16.mxu0 0
  %2453 = vmatpush2.bf16.msra.mxu0 0
  %2454 = vmatprep.subr.bf16.mxu0 0
  %2455 = vmatpush2.bf16.msra.mxu0 0
  %2456 = vmatprep.subr.bf16.mxu0 0
  %2457 = vmatpush2.bf16.msra.mxu0 0
  %2458 = vmatprep.subr.bf16.mxu0 0
  %2459 = vmatpush2.bf16.msra.mxu0 0
  %2460 = vmatprep.mubr.bf16.mxu0 0
  %2461 = vmatmul.mubr.bf16.gmra.mxu0 %v2426
  %v2462 = vpop.f32.mrf.mxu0
  %v2463 = vadd.f32 0.0, %v2462
  %v2464 = vpop.f32.mrf.mxu0
  %v2465 = vpop.f32.mrf.mxu0
  %v2466 = vpop.f32.mrf.mxu0
  %2467 = vdwg.mxu0
  %2469 = vrot.lane.b32.xlu0 %v2463, 64
  %v2470 = vpop.permute.xlu0 %2469
  %v2472 = vadd.f32 %v2267, %v2470
  %v2473 = vmax.f32 %v2472, 0.0
  %2475 = vrot.lane.b32.xlu0 %v2423, 64
  %v2476 = vpop.permute.xlu0 %2475
  %v2478 = vsel %vm714, %v2476, %v2473
  %v2479 = vpack.c.bf16 %v2478, %v2478
  %v2480 = vld [vmem:[%s14] sm:$0xf]
  %v2481 = vld [vmem:[%s14 + $0x4] sm:$0xf]
  %v2482 = vld [vmem:[%s14 + $0x8] sm:$0xf]
  %v2483 = vld [vmem:[%s14 + $0xc] sm:$0xf]
  %v2484 = vld [vmem:[%s14 + $0x10] sm:$0xf]
  %v2485 = vld [vmem:[%s14 + $0x14] sm:$0xf]
  %v2486 = vld [vmem:[%s14 + $0x18] sm:$0xf]
  %v2487 = vld [vmem:[%s14 + $0x1c] sm:$0xf]
  %v2488 = vld [vmem:[%s14 + $0x20] sm:$0xf]
  %v2489 = vld [vmem:[%s14 + $0x24] sm:$0xf]
  %v2490 = vld [vmem:[%s14 + $0x28] sm:$0xf]
  %v2491 = vld [vmem:[%s14 + $0x2c] sm:$0xf]
  %v2492 = vld [vmem:[%s14 + $0x30] sm:$0xf]
  %v2493 = vld [vmem:[%s14 + $0x34] sm:$0xf]
  %v2494 = vld [vmem:[%s14 + $0x38] sm:$0xf]
  %v2495 = vld [vmem:[%s14 + $0x3c] sm:$0xf]
  %v2496 = vld [vmem:[%s15] sm:$0x1]
  %v2498 = vlaneseq
  %v2499 = vshrl.u32 %v2498, 7
  %v2500 = vsub.s32 0, %v2499
  %v2501 = vrot.slane %v2496, %v2500
  %v2519 = vunpack.c.l.b16 %v2480
  %v2520 = vunpack.c.l.b16 %v2481
  %v2521 = vunpack.c.l.b16 %v2482
  %v2522 = vunpack.c.l.b16 %v2483
  %v2523 = vunpack.c.l.b16 %v2484
  %v2524 = vunpack.c.l.b16 %v2485
  %v2525 = vunpack.c.l.b16 %v2486
  %v2526 = vunpack.c.l.b16 %v2487
  %v2527 = vunpack.c.l.b16 %v2488
  %v2528 = vunpack.c.l.b16 %v2489
  %v2529 = vunpack.c.l.b16 %v2490
  %v2530 = vunpack.c.l.b16 %v2491
  %v2531 = vunpack.c.l.b16 %v2492
  %v2532 = vunpack.c.l.b16 %v2493
  %v2533 = vunpack.c.l.b16 %v2494
  %v2534 = vunpack.c.l.b16 %v2495
  %v2535 = vpack.c.b16 %v2520, %v2519
  %v2536 = vpack.c.b16 %v2522, %v2521
  %v2537 = vpack.c.b16 %v2524, %v2523
  %v2538 = vpack.c.b16 %v2526, %v2525
  %v2539 = vpack.c.b16 %v2528, %v2527
  %v2540 = vpack.c.b16 %v2530, %v2529
  %v2541 = vpack.c.b16 %v2532, %v2531
  %v2542 = vpack.c.b16 %v2534, %v2533
  %2551 = vmatprep.subr.bf16.mxu0 0
  %2552 = vmatpush1.bf16.msra.mxu0 %v2542
  %2553 = vmatprep.subr.bf16.mxu0 0
  %2554 = vmatpush1.bf16.msra.mxu0 %v2541
  %2555 = vmatprep.subr.bf16.mxu0 0
  %2556 = vmatpush1.bf16.msra.mxu0 %v2540
  %2557 = vmatprep.subr.bf16.mxu0 0
  %2558 = vmatpush1.bf16.msra.mxu0 %v2539
  %2559 = vmatprep.subr.bf16.mxu0 0
  %2560 = vmatpush1.bf16.msra.mxu0 %v2538
  %2561 = vmatprep.subr.bf16.mxu0 0
  %2562 = vmatpush1.bf16.msra.mxu0 %v2537
  %2563 = vmatprep.subr.bf16.mxu0 0
  %2564 = vmatpush1.bf16.msra.mxu0 %v2536
  %2565 = vmatprep.subr.bf16.mxu0 0
  %2566 = vmatpush1.bf16.msra.mxu0 %v2535
  %2567 = vmatprep.subr.bf16.mxu0 0
  %2568 = vmatpush2.bf16.msra.mxu0 0
  %2569 = vmatprep.subr.bf16.mxu0 0
  %2570 = vmatpush2.bf16.msra.mxu0 0
  %2571 = vmatprep.subr.bf16.mxu0 0
  %2572 = vmatpush2.bf16.msra.mxu0 0
  %2573 = vmatprep.subr.bf16.mxu0 0
  %2574 = vmatpush2.bf16.msra.mxu0 0
  %2575 = vmatprep.subr.bf16.mxu0 0
  %2576 = vmatpush2.bf16.msra.mxu0 0
  %2577 = vmatprep.subr.bf16.mxu0 0
  %2578 = vmatpush2.bf16.msra.mxu0 0
  %2579 = vmatprep.subr.bf16.mxu0 0
  %2580 = vmatpush2.bf16.msra.mxu0 0
  %2581 = vmatprep.subr.bf16.mxu0 0
  %2582 = vmatpush2.bf16.msra.mxu0 0
  %2583 = vmatprep.mubr.bf16.mxu0 0
  %2584 = vmatmul.mubr.bf16.gmra.mxu0 %v2479
  %v2585 = vpop.f32.mrf.mxu0
  %v2586 = vadd.f32 %v2501, %v2585
  %v2587 = vpop.f32.mrf.mxu0
  %v2588 = vpop.f32.mrf.mxu0
  %v2589 = vpop.f32.mrf.mxu0
  %2590 = vdwg.mxu0
  %2592 = vrot.lane.b32.xlu0 %v2586, 3
  %v2593 = vpop.permute.xlu0 %2592
  %v2595 = vsel %vm2368, %v2365, %v2593
  %vm2596 = vcmask 39936
  %v2597 = vsel %vm2596, %v2595, 0.0
  %2598 = vst [vmem:[%s16] sm:$0x3] %v2597
  // Predicated region
  $region66: #{_forward_impl.1} parent=0 // pred_check
    _
  $region67: #{_forward_impl.1} parent=0 // pred_check_branch
    %2600 = sbr.rel (0) target = $region69
  $region68: #{_forward_impl.1} parent=0 // pred_region
    _
  $region69: #{_forward_impl.1} parent=0 // pred_fallthru
    _
  // Predicated region
  $region70: #{_forward_impl.1} parent=0 // pred_check
    _
  $region71: #{_forward_impl.1} parent=0 // pred_check_branch
    %2602 = sbr.rel (0) target = $region73
  $region72: #{_forward_impl.1} parent=0 // pred_region
    _
  $region73: #{_forward_impl.1} parent=0 // pred_fallthru
    _

</llo_original>
